<compile_context>
chip_gen: v5e
topology: v5e:2x2
jax: 0.10.0
libtpu: 0.0.40
codegen_flags: <defaults>
</compile_context>

<pallas_src>
import functools

import jax
import jax.numpy as jnp
import numpy as np
from jax.experimental import pallas as pl
from jax.experimental.pallas import tpu as pltpu


def _sel_constants(l_in, l_out, K, B, upsample):
    """(K, B*l_in, B*l_out) 0/1 constants, block-diagonal over B lane-packed segments.

    For tap m and segment b: (h @ S[m])[c, b*l_out + t] == hpadup[c, b, t + m - (K-1)],
    where hpadup is segment b of h, optionally nearest-x2 upsampled along length and
    zero-padded by K-1 on both sides.  Out-of-range / cross-segment entries simply
    have no 1, realizing both the transposed-conv zero padding and the batch
    segmentation for free.  Built with numpy at trace time (pure function of static
    shapes) so the kernel never reconstructs them.
    """
    i = np.arange(l_in)[:, None]               # source index within segment
    t = np.arange(l_out)[None, :]               # output position within segment
    taps = []
    for m in range(K):
        p = t + m - (K - 1)                     # position in (upsampled) padded input
        if upsample:
            hit = (p >= 0) & (p < 2 * l_in) & (i == p // 2)
        else:
            hit = (p >= 0) & (p < l_in) & (i == p)
        taps.append(hit.astype(np.float32))
    S = np.stack(taps)                          # (K, l_in, l_out), single segment
    out = np.zeros((K, B * l_in, B * l_out), np.float32)
    for b in range(B):
        out[:, b * l_in:(b + 1) * l_in, b * l_out:(b + 1) * l_out] = S
    return out


def _fold_weight(w):
    """(K, Cin, Cout) -> (K, Cout, Cin): tap-flipped, one (Cout, Cin) matrix per tap."""
    K = w.shape[0]
    return jnp.stack([w[K - 1 - m].T for m in range(K)])


def _make_decode_kernel(K, compute_dtype):
    def kernel(x_ref, w1_ref, b1_ref, s1_ref, w2_ref, b2_ref, s2_ref,
               w3_ref, b3_ref, s3_ref, o_ref):
        # x_ref : (1, C, B*L0)          lane-packed batch segment (NCL layout)
        # wN_ref: (K, CoutN, C)         tap-flipped weights (one matrix per tap)
        # bN_ref: (CoutN, 1)
        # sN_ref: (K, B*l_in, B*l_out)  hoisted pad/upsample/shift 0/1 constants
        # o_ref : (1, 1, B*L3)          lane-dense output slab

        def layer(h, w_ref, b_ref, s_ref, elu):
            hc = h.astype(compute_dtype)
            acc = b_ref[...]                                   # f32 (Cout, 1)
            for m in range(K):
                # small-matrix-first: (Cout,C)@(C,Win) then (Cout,Win)@(Win,Wout)
                y = jnp.dot(w_ref[m], hc, preferred_element_type=jnp.float32)
                acc = acc + jnp.dot(y.astype(compute_dtype), s_ref[m],
                                    preferred_element_type=jnp.float32)
            if elu:
                # TODO(synk): jnp.expm1 would avoid cancellation near 0; kept as
                # exp(x)-1 for guaranteed Mosaic lowering (within tolerance).
                acc = jnp.where(acc > 0, acc, jnp.exp(acc) - 1.0)   # ELU(a=1)
            return acc

        h = x_ref[0].astype(jnp.float32)                       # (C, B*L0)
        h = layer(h, w1_ref, b1_ref, s1_ref, elu=True)         # (C, B*L1)
        h = layer(h, w2_ref, b2_ref, s2_ref, elu=True)         # (C, B*L2)
        h = layer(h, w3_ref, b3_ref, s3_ref, elu=False)        # (1, B*L3)
        o_ref[0] = h.astype(o_ref.dtype)

    return kernel


@functools.partial(jax.jit, static_argnames=("lane_batch", "compute_dtype"))
def decode_forward(x_ncl, params, *, lane_batch=4, compute_dtype=jnp.float32):
    """Equivalent of Decode.forward.  x_ncl: (N, C, L) -> (N, 1, 4*L + 14)."""
    N, C, L0 = x_ncl.shape
    K = params["w1"].shape[0]
    L1 = L0 + K - 1
    L2 = 2 * L1 + K - 1
    L3 = 2 * L2 + K - 1

    B = max(1, min(lane_batch, N))      # batch elements lane-packed per grid step
    G = pl.cdiv(N, B)                   # grid steps (keep >= 2 on v7x: 2 TCs)
    Np = G * B
    if Np != N:
        x_ncl = jnp.concatenate(
            [x_ncl, jnp.zeros((Np - N, C, L0), x_ncl.dtype)], axis=0)

    # Lane-pack B elements per grid step: (G, C, B*L0).  Pure layout plumbing,
    # done once by XLA outside the kernel.
    x_packed = x_ncl.reshape(G, B, C, L0).transpose(0, 2, 1, 3).reshape(G, C, B * L0)

    # One-time trace-time constants (weights refolded per tap, selection matrices
    # hoisted).  compute_dtype=bfloat16 halves MXU passes on v6e/v7x if desired.
    cdt = compute_dtype
    w1 = _fold_weight(params["w1"]).astype(cdt)            # (K, C, C)
    w2 = _fold_weight(params["w2"]).astype(cdt)            # (K, C, C)
    w3 = _fold_weight(params["w3"]).astype(cdt)            # (K, 1, C)
    b1 = params["b1"].reshape(C, 1).astype(jnp.float32)
    b2 = params["b2"].reshape(C, 1).astype(jnp.float32)
    b3 = params["b3"].reshape(1, 1).astype(jnp.float32)
    s1 = jnp.asarray(_sel_constants(L0, L1, K, B, upsample=False), dtype=cdt)
    s2 = jnp.asarray(_sel_constants(L1, L2, K, B, upsample=True), dtype=cdt)
    s3 = jnp.asarray(_sel_constants(L2, L3, K, B, upsample=True), dtype=cdt)

    const3 = lambda g: (0, 0, 0)
    const2 = lambda g: (0, 0)

    out = pl.pallas_call(
        _make_decode_kernel(K, cdt),
        out_shape=jax.ShapeDtypeStruct((G, 1, B * L3), x_ncl.dtype),
        grid=(G,),
        in_specs=[
            pl.BlockSpec((1, C, B * L0), lambda g: (g, 0, 0)),
            pl.BlockSpec((K, C, C), const3),
            pl.BlockSpec((C, 1), const2),
            pl.BlockSpec((K, B * L0, B * L1), const3),
            pl.BlockSpec((K, C, C), const3),
            pl.BlockSpec((C, 1), const2),
            pl.BlockSpec((K, B * L1, B * L2), const3),
            pl.BlockSpec((K, 1, C), const3),
            pl.BlockSpec((1, 1), const2),
            pl.BlockSpec((K, B * L2, B * L3), const3),
        ],
        out_specs=pl.BlockSpec((1, 1, B * L3), lambda g: (g, 0, 0)),
        compiler_params=pltpu.CompilerParams(
            dimension_semantics=("parallel",)),   # 2 balanced steps -> both v7x TCs
    )(x_packed, w1, b1, s1, w2, b2, s2, w3, b3, s3)

    # (G, 1, B*L3) -> (N, 1, L3): segments are contiguous batch-major in the slab.
    return out.reshape(Np, 1, L3)[:N]


# ----------------------------- pure-JAX reference -----------------------------
def _elu(x):
    return jnp.where(x > 0, x, jnp.exp(x) - 1.0)


def _convt_ref(x_ncl, w, b):
    K, Cin, Cout = w.shape
    w_oik = jnp.transpose(w[::-1], (2, 1, 0))   # (Cout, Cin, K), taps flipped
    y = jax.lax.conv_general_dilated(
        x_ncl, w_oik, window_strides=(1,), padding=[(K - 1, K - 1)],
        dimension_numbers=("NCH", "OIH", "NCH"),
        precision=jax.lax.Precision.HIGHEST)
    return y + b.reshape(1, Cout, 1)


def decode_ref(x_ncl, params):
    h = _elu(_convt_ref(x_ncl, params["w1"], params["b1"]))
    h = jnp.repeat(h, 2, axis=2)
    h = _elu(_convt_ref(h, params["w2"], params["b2"]))
    h = jnp.repeat(h, 2, axis=2)
    return _convt_ref(h, params["w3"], params["b3"])


if __name__ == "__main__":
    N, C, L, K = 8, 128, 12, 3   # module defaults: channels=128, kernel_size=3

    key = jax.random.PRNGKey(0)
    ks = jax.random.split(key, 7)
    bound = 1.0 / np.sqrt(C * K)
    params = {
        # weights stored as (K, Cin, Cout); torch layout is (Cin, Cout, K)
        "w1": jax.random.uniform(ks[0], (K, C, C), jnp.float32, -bound, bound),
        "b1": jax.random.uniform(ks[1], (C,), jnp.float32, -bound, bound),
        "w2": jax.random.uniform(ks[2], (K, C, C), jnp.float32, -bound, bound),
        "b2": jax.random.uniform(ks[3], (C,), jnp.float32, -bound, bound),
        "w3": jax.random.uniform(ks[4], (K, C, 1), jnp.float32, -bound, bound),
        "b3": jax.random.uniform(ks[5], (1,), jnp.float32, -bound, bound),
    }
    x = jax.random.normal(ks[6], (N, C, L), jnp.float32)

    # lane_batch=4 with N=8 -> grid=(2,): two fat lane-packed steps.
    out = jax.block_until_ready(decode_forward(x, params))
    ref = jax.block_until_ready(decode_ref(x, params))

    assert out.shape == (N, 1, 4 * L + 14), out.shape
    np.testing.assert_allclose(np.asarray(out), np.asarray(ref),
                               rtol=5e-3, atol=5e-3)
    print("KERNEL_OK")
</pallas_src>

<mosaic_0001>
module attributes {stable_mosaic.version = 11 : i64} {
  func.func @kernel(%arg0: i32, %arg1: memref<1x128x48xf32, #tpu.memory_space<vmem>>, %arg2: memref<3x128x128xf32, #tpu.memory_space<vmem>>, %arg3: memref<128x1xf32, #tpu.memory_space<vmem>>, %arg4: memref<3x48x56xf32, #tpu.memory_space<vmem>>, %arg5: memref<3x128x128xf32, #tpu.memory_space<vmem>>, %arg6: memref<128x1xf32, #tpu.memory_space<vmem>>, %arg7: memref<3x56x120xf32, #tpu.memory_space<vmem>>, %arg8: memref<3x1x128xf32, #tpu.memory_space<vmem>>, %arg9: memref<1x1xf32, #tpu.memory_space<vmem>>, %arg10: memref<3x120x248xf32, #tpu.memory_space<vmem>>, %arg11: memref<1x1x248xf32, #tpu.memory_space<vmem>>) attributes {dimension_semantics = [#tpu.dimension_semantics<parallel>], iteration_bounds = array<i64: 2>, scalar_prefetch = 0 : i64, scratch_operands = 0 : i64, tpu.core_type = #tpu.core_type<tc>, window_params = [{transform_indices = @transform_0, window_bounds = array<i64: 1, 128, 48>}, {pipeline_mode = #tpu.pipeline_mode<synchronous>, transform_indices = @transform_1, window_bounds = array<i64: 3, 128, 128>}, {pipeline_mode = #tpu.pipeline_mode<synchronous>, transform_indices = @transform_2, window_bounds = array<i64: 128, 1>}, {pipeline_mode = #tpu.pipeline_mode<synchronous>, transform_indices = @transform_3, window_bounds = array<i64: 3, 48, 56>}, {pipeline_mode = #tpu.pipeline_mode<synchronous>, transform_indices = @transform_4, window_bounds = array<i64: 3, 128, 128>}, {pipeline_mode = #tpu.pipeline_mode<synchronous>, transform_indices = @transform_5, window_bounds = array<i64: 128, 1>}, {pipeline_mode = #tpu.pipeline_mode<synchronous>, transform_indices = @transform_6, window_bounds = array<i64: 3, 56, 120>}, {pipeline_mode = #tpu.pipeline_mode<synchronous>, transform_indices = @transform_7, window_bounds = array<i64: 3, 1, 128>}, {pipeline_mode = #tpu.pipeline_mode<synchronous>, transform_indices = @transform_8, window_bounds = array<i64: 1, 1>}, {pipeline_mode = #tpu.pipeline_mode<synchronous>, transform_indices = @transform_9, window_bounds = array<i64: 3, 120, 248>}, {transform_indices = @transform_10, window_bounds = array<i64: 1, 1, 248>}]} {
    %c0 = arith.constant 0 : index
    %c0_0 = arith.constant 0 : index
    %c0_1 = arith.constant 0 : index
    %0 = vector.load %arg1[%c0, %c0_0, %c0_1] : memref<1x128x48xf32, #tpu.memory_space<vmem>>, vector<1x128x48xf32>
    %1 = vector.shape_cast %0 : vector<1x128x48xf32> to vector<128x48xf32>
    %c0_2 = arith.constant 0 : index
    %c0_3 = arith.constant 0 : index
    %2 = vector.load %arg3[%c0_2, %c0_3] : memref<128x1xf32, #tpu.memory_space<vmem>>, vector<128x1xf32>
    %c0_4 = arith.constant 0 : index
    %c0_5 = arith.constant 0 : index
    %c0_6 = arith.constant 0 : index
    %3 = vector.load %arg2[%c0_4, %c0_5, %c0_6] : memref<3x128x128xf32, #tpu.memory_space<vmem>>, vector<1x128x128xf32>
    %4 = vector.shape_cast %3 : vector<1x128x128xf32> to vector<128x128xf32>
    %cst = arith.constant dense<0.000000e+00> : vector<128x48xf32>
    %5 = tpu.matmul %4, %1, %cst {dimension_numbers = #tpu.dot_dimension_numbers<[1], [0], [0], [1], [0, 0, 1, 1], [], []>} : vector<128x128xf32>, vector<128x48xf32>, vector<128x48xf32> -> vector<128x48xf32>
    %c0_7 = arith.constant 0 : index
    %c0_8 = arith.constant 0 : index
    %c0_9 = arith.constant 0 : index
    %6 = vector.load %arg4[%c0_7, %c0_8, %c0_9] : memref<3x48x56xf32, #tpu.memory_space<vmem>>, vector<1x48x56xf32>
    %7 = vector.shape_cast %6 : vector<1x48x56xf32> to vector<48x56xf32>
    %cst_10 = arith.constant dense<0.000000e+00> : vector<128x56xf32>
    %8 = tpu.matmul %5, %7, %cst_10 {dimension_numbers = #tpu.dot_dimension_numbers<[1], [0], [0], [1], [0, 0, 1, 1], [], []>} : vector<128x48xf32>, vector<48x56xf32>, vector<128x56xf32> -> vector<128x56xf32>
    %9 = vector.broadcast %2 : vector<128x1xf32> to vector<128x56xf32>
    %10 = arith.addf %9, %8 : vector<128x56xf32>
    %c1 = arith.constant 1 : index
    %c0_11 = arith.constant 0 : index
    %c0_12 = arith.constant 0 : index
    %11 = vector.load %arg2[%c1, %c0_11, %c0_12] : memref<3x128x128xf32, #tpu.memory_space<vmem>>, vector<1x128x128xf32>
    %12 = vector.shape_cast %11 : vector<1x128x128xf32> to vector<128x128xf32>
    %cst_13 = arith.constant dense<0.000000e+00> : vector<128x48xf32>
    %13 = tpu.matmul %12, %1, %cst_13 {dimension_numbers = #tpu.dot_dimension_numbers<[1], [0], [0], [1], [0, 0, 1, 1], [], []>} : vector<128x128xf32>, vector<128x48xf32>, vector<128x48xf32> -> vector<128x48xf32>
    %c1_14 = arith.constant 1 : index
    %c0_15 = arith.constant 0 : index
    %c0_16 = arith.constant 0 : index
    %14 = vector.load %arg4[%c1_14, %c0_15, %c0_16] : memref<3x48x56xf32, #tpu.memory_space<vmem>>, vector<1x48x56xf32>
    %15 = vector.shape_cast %14 : vector<1x48x56xf32> to vector<48x56xf32>
    %cst_17 = arith.constant dense<0.000000e+00> : vector<128x56xf32>
    %16 = tpu.matmul %13, %15, %cst_17 {dimension_numbers = #tpu.dot_dimension_numbers<[1], [0], [0], [1], [0, 0, 1, 1], [], []>} : vector<128x48xf32>, vector<48x56xf32>, vector<128x56xf32> -> vector<128x56xf32>
    %17 = arith.addf %10, %16 : vector<128x56xf32>
    %c2 = arith.constant 2 : index
    %c0_18 = arith.constant 0 : index
    %c0_19 = arith.constant 0 : index
    %18 = vector.load %arg2[%c2, %c0_18, %c0_19] : memref<3x128x128xf32, #tpu.memory_space<vmem>>, vector<1x128x128xf32>
    %19 = vector.shape_cast %18 : vector<1x128x128xf32> to vector<128x128xf32>
    %cst_20 = arith.constant dense<0.000000e+00> : vector<128x48xf32>
    %20 = tpu.matmul %19, %1, %cst_20 {dimension_numbers = #tpu.dot_dimension_numbers<[1], [0], [0], [1], [0, 0, 1, 1], [], []>} : vector<128x128xf32>, vector<128x48xf32>, vector<128x48xf32> -> vector<128x48xf32>
    %c2_21 = arith.constant 2 : index
    %c0_22 = arith.constant 0 : index
    %c0_23 = arith.constant 0 : index
    %21 = vector.load %arg4[%c2_21, %c0_22, %c0_23] : memref<3x48x56xf32, #tpu.memory_space<vmem>>, vector<1x48x56xf32>
    %22 = vector.shape_cast %21 : vector<1x48x56xf32> to vector<48x56xf32>
    %cst_24 = arith.constant dense<0.000000e+00> : vector<128x56xf32>
    %23 = tpu.matmul %20, %22, %cst_24 {dimension_numbers = #tpu.dot_dimension_numbers<[1], [0], [0], [1], [0, 0, 1, 1], [], []>} : vector<128x48xf32>, vector<48x56xf32>, vector<128x56xf32> -> vector<128x56xf32>
    %24 = arith.addf %17, %23 : vector<128x56xf32>
    %cst_25 = arith.constant 0.000000e+00 : f32
    %25 = vector.broadcast %cst_25 : f32 to vector<128x56xf32>
    %26 = arith.cmpf ogt, %24, %25 : vector<128x56xf32>
    %27 = math.exp %24 : vector<128x56xf32>
    %cst_26 = arith.constant 1.000000e+00 : f32
    %28 = vector.broadcast %cst_26 : f32 to vector<128x56xf32>
    %29 = arith.subf %27, %28 : vector<128x56xf32>
    %30 = arith.select %26, %24, %29 : vector<128x56xi1>, vector<128x56xf32>
    %c0_27 = arith.constant 0 : index
    %c0_28 = arith.constant 0 : index
    %31 = vector.load %arg6[%c0_27, %c0_28] : memref<128x1xf32, #tpu.memory_space<vmem>>, vector<128x1xf32>
    %c0_29 = arith.constant 0 : index
    %c0_30 = arith.constant 0 : index
    %c0_31 = arith.constant 0 : index
    %32 = vector.load %arg5[%c0_29, %c0_30, %c0_31] : memref<3x128x128xf32, #tpu.memory_space<vmem>>, vector<1x128x128xf32>
    %33 = vector.shape_cast %32 : vector<1x128x128xf32> to vector<128x128xf32>
    %cst_32 = arith.constant dense<0.000000e+00> : vector<128x56xf32>
    %34 = tpu.matmul %33, %30, %cst_32 {dimension_numbers = #tpu.dot_dimension_numbers<[1], [0], [0], [1], [0, 0, 1, 1], [], []>} : vector<128x128xf32>, vector<128x56xf32>, vector<128x56xf32> -> vector<128x56xf32>
    %c0_33 = arith.constant 0 : index
    %c0_34 = arith.constant 0 : index
    %c0_35 = arith.constant 0 : index
    %35 = vector.load %arg7[%c0_33, %c0_34, %c0_35] : memref<3x56x120xf32, #tpu.memory_space<vmem>>, vector<1x56x120xf32>
    %36 = vector.shape_cast %35 : vector<1x56x120xf32> to vector<56x120xf32>
    %cst_36 = arith.constant dense<0.000000e+00> : vector<128x120xf32>
    %37 = tpu.matmul %34, %36, %cst_36 {dimension_numbers = #tpu.dot_dimension_numbers<[1], [0], [0], [1], [0, 0, 1, 1], [], []>} : vector<128x56xf32>, vector<56x120xf32>, vector<128x120xf32> -> vector<128x120xf32>
    %38 = vector.broadcast %31 : vector<128x1xf32> to vector<128x120xf32>
    %39 = arith.addf %38, %37 : vector<128x120xf32>
    %c1_37 = arith.constant 1 : index
    %c0_38 = arith.constant 0 : index
    %c0_39 = arith.constant 0 : index
    %40 = vector.load %arg5[%c1_37, %c0_38, %c0_39] : memref<3x128x128xf32, #tpu.memory_space<vmem>>, vector<1x128x128xf32>
    %41 = vector.shape_cast %40 : vector<1x128x128xf32> to vector<128x128xf32>
    %cst_40 = arith.constant dense<0.000000e+00> : vector<128x56xf32>
    %42 = tpu.matmul %41, %30, %cst_40 {dimension_numbers = #tpu.dot_dimension_numbers<[1], [0], [0], [1], [0, 0, 1, 1], [], []>} : vector<128x128xf32>, vector<128x56xf32>, vector<128x56xf32> -> vector<128x56xf32>
    %c1_41 = arith.constant 1 : index
    %c0_42 = arith.constant 0 : index
    %c0_43 = arith.constant 0 : index
    %43 = vector.load %arg7[%c1_41, %c0_42, %c0_43] : memref<3x56x120xf32, #tpu.memory_space<vmem>>, vector<1x56x120xf32>
    %44 = vector.shape_cast %43 : vector<1x56x120xf32> to vector<56x120xf32>
    %cst_44 = arith.constant dense<0.000000e+00> : vector<128x120xf32>
    %45 = tpu.matmul %42, %44, %cst_44 {dimension_numbers = #tpu.dot_dimension_numbers<[1], [0], [0], [1], [0, 0, 1, 1], [], []>} : vector<128x56xf32>, vector<56x120xf32>, vector<128x120xf32> -> vector<128x120xf32>
    %46 = arith.addf %39, %45 : vector<128x120xf32>
    %c2_45 = arith.constant 2 : index
    %c0_46 = arith.constant 0 : index
    %c0_47 = arith.constant 0 : index
    %47 = vector.load %arg5[%c2_45, %c0_46, %c0_47] : memref<3x128x128xf32, #tpu.memory_space<vmem>>, vector<1x128x128xf32>
    %48 = vector.shape_cast %47 : vector<1x128x128xf32> to vector<128x128xf32>
    %cst_48 = arith.constant dense<0.000000e+00> : vector<128x56xf32>
    %49 = tpu.matmul %48, %30, %cst_48 {dimension_numbers = #tpu.dot_dimension_numbers<[1], [0], [0], [1], [0, 0, 1, 1], [], []>} : vector<128x128xf32>, vector<128x56xf32>, vector<128x56xf32> -> vector<128x56xf32>
    %c2_49 = arith.constant 2 : index
    %c0_50 = arith.constant 0 : index
    %c0_51 = arith.constant 0 : index
    %50 = vector.load %arg7[%c2_49, %c0_50, %c0_51] : memref<3x56x120xf32, #tpu.memory_space<vmem>>, vector<1x56x120xf32>
    %51 = vector.shape_cast %50 : vector<1x56x120xf32> to vector<56x120xf32>
    %cst_52 = arith.constant dense<0.000000e+00> : vector<128x120xf32>
    %52 = tpu.matmul %49, %51, %cst_52 {dimension_numbers = #tpu.dot_dimension_numbers<[1], [0], [0], [1], [0, 0, 1, 1], [], []>} : vector<128x56xf32>, vector<56x120xf32>, vector<128x120xf32> -> vector<128x120xf32>
    %53 = arith.addf %46, %52 : vector<128x120xf32>
    %cst_53 = arith.constant 0.000000e+00 : f32
    %54 = vector.broadcast %cst_53 : f32 to vector<128x120xf32>
    %55 = arith.cmpf ogt, %53, %54 : vector<128x120xf32>
    %56 = math.exp %53 : vector<128x120xf32>
    %cst_54 = arith.constant 1.000000e+00 : f32
    %57 = vector.broadcast %cst_54 : f32 to vector<128x120xf32>
    %58 = arith.subf %56, %57 : vector<128x120xf32>
    %59 = arith.select %55, %53, %58 : vector<128x120xi1>, vector<128x120xf32>
    %c0_55 = arith.constant 0 : index
    %c0_56 = arith.constant 0 : index
    %60 = vector.load %arg9[%c0_55, %c0_56] : memref<1x1xf32, #tpu.memory_space<vmem>>, vector<1x1xf32>
    %c0_57 = arith.constant 0 : index
    %c0_58 = arith.constant 0 : index
    %c0_59 = arith.constant 0 : index
    %61 = vector.load %arg8[%c0_57, %c0_58, %c0_59] : memref<3x1x128xf32, #tpu.memory_space<vmem>>, vector<1x1x128xf32>
    %62 = vector.shape_cast %61 : vector<1x1x128xf32> to vector<1x128xf32>
    %cst_60 = arith.constant dense<0.000000e+00> : vector<1x120xf32>
    %63 = tpu.matmul %62, %59, %cst_60 {dimension_numbers = #tpu.dot_dimension_numbers<[1], [0], [0], [1], [0, 0, 1, 1], [], []>} : vector<1x128xf32>, vector<128x120xf32>, vector<1x120xf32> -> vector<1x120xf32>
    %c0_61 = arith.constant 0 : index
    %c0_62 = arith.constant 0 : index
    %c0_63 = arith.constant 0 : index
    %64 = vector.load %arg10[%c0_61, %c0_62, %c0_63] : memref<3x120x248xf32, #tpu.memory_space<vmem>>, vector<1x120x248xf32>
    %65 = vector.shape_cast %64 : vector<1x120x248xf32> to vector<120x248xf32>
    %cst_64 = arith.constant dense<0.000000e+00> : vector<1x248xf32>
    %66 = tpu.matmul %63, %65, %cst_64 {dimension_numbers = #tpu.dot_dimension_numbers<[1], [0], [0], [1], [0, 0, 1, 1], [], []>} : vector<1x120xf32>, vector<120x248xf32>, vector<1x248xf32> -> vector<1x248xf32>
    %67 = vector.broadcast %60 : vector<1x1xf32> to vector<1x248xf32>
    %68 = arith.addf %67, %66 : vector<1x248xf32>
    %c1_65 = arith.constant 1 : index
    %c0_66 = arith.constant 0 : index
    %c0_67 = arith.constant 0 : index
    %69 = vector.load %arg8[%c1_65, %c0_66, %c0_67] : memref<3x1x128xf32, #tpu.memory_space<vmem>>, vector<1x1x128xf32>
    %70 = vector.shape_cast %69 : vector<1x1x128xf32> to vector<1x128xf32>
    %cst_68 = arith.constant dense<0.000000e+00> : vector<1x120xf32>
    %71 = tpu.matmul %70, %59, %cst_68 {dimension_numbers = #tpu.dot_dimension_numbers<[1], [0], [0], [1], [0, 0, 1, 1], [], []>} : vector<1x128xf32>, vector<128x120xf32>, vector<1x120xf32> -> vector<1x120xf32>
    %c1_69 = arith.constant 1 : index
    %c0_70 = arith.constant 0 : index
    %c0_71 = arith.constant 0 : index
    %72 = vector.load %arg10[%c1_69, %c0_70, %c0_71] : memref<3x120x248xf32, #tpu.memory_space<vmem>>, vector<1x120x248xf32>
    %73 = vector.shape_cast %72 : vector<1x120x248xf32> to vector<120x248xf32>
    %cst_72 = arith.constant dense<0.000000e+00> : vector<1x248xf32>
    %74 = tpu.matmul %71, %73, %cst_72 {dimension_numbers = #tpu.dot_dimension_numbers<[1], [0], [0], [1], [0, 0, 1, 1], [], []>} : vector<1x120xf32>, vector<120x248xf32>, vector<1x248xf32> -> vector<1x248xf32>
    %75 = arith.addf %68, %74 : vector<1x248xf32>
    %c2_73 = arith.constant 2 : index
    %c0_74 = arith.constant 0 : index
    %c0_75 = arith.constant 0 : index
    %76 = vector.load %arg8[%c2_73, %c0_74, %c0_75] : memref<3x1x128xf32, #tpu.memory_space<vmem>>, vector<1x1x128xf32>
    %77 = vector.shape_cast %76 : vector<1x1x128xf32> to vector<1x128xf32>
    %cst_76 = arith.constant dense<0.000000e+00> : vector<1x120xf32>
    %78 = tpu.matmul %77, %59, %cst_76 {dimension_numbers = #tpu.dot_dimension_numbers<[1], [0], [0], [1], [0, 0, 1, 1], [], []>} : vector<1x128xf32>, vector<128x120xf32>, vector<1x120xf32> -> vector<1x120xf32>
    %c2_77 = arith.constant 2 : index
    %c0_78 = arith.constant 0 : index
    %c0_79 = arith.constant 0 : index
    %79 = vector.load %arg10[%c2_77, %c0_78, %c0_79] : memref<3x120x248xf32, #tpu.memory_space<vmem>>, vector<1x120x248xf32>
    %80 = vector.shape_cast %79 : vector<1x120x248xf32> to vector<120x248xf32>
    %cst_80 = arith.constant dense<0.000000e+00> : vector<1x248xf32>
    %81 = tpu.matmul %78, %80, %cst_80 {dimension_numbers = #tpu.dot_dimension_numbers<[1], [0], [0], [1], [0, 0, 1, 1], [], []>} : vector<1x120xf32>, vector<120x248xf32>, vector<1x248xf32> -> vector<1x248xf32>
    %82 = arith.addf %75, %81 : vector<1x248xf32>
    %c0_81 = arith.constant 0 : index
    %c0_82 = arith.constant 0 : index
    %c0_83 = arith.constant 0 : index
    %83 = vector.load %arg11[%c0_81, %c0_82, %c0_83] : memref<1x1x248xf32, #tpu.memory_space<vmem>>, vector<1x1x248xf32>
    %84 = vector.shape_cast %83 : vector<1x1x248xf32> to vector<1x248xf32>
    %85 = vector.shape_cast %82 : vector<1x248xf32> to vector<1x1x248xf32>
    tpu.vector_store %arg11[%c0_81, %c0_82, %c0_83], %85 {strides = array<i32>} : memref<1x1x248xf32, #tpu.memory_space<vmem>>, vector<1x1x248xf32>,
    return
  }
  func.func @transform_0(%arg0: i32) -> (i32, i32, i32) {
    %c0_i32 = arith.constant 0 : i32
    %c0_i32_0 = arith.constant 0 : i32
    %c0_i32_1 = arith.constant 0 : i32
    return %arg0, %c0_i32, %c0_i32_0 : i32, i32, i32
  }
  func.func @transform_1(%arg0: i32) -> (i32, i32, i32) {
    %c0_i32 = arith.constant 0 : i32
    %c0_i32_0 = arith.constant 0 : i32
    %c0_i32_1 = arith.constant 0 : i32
    %c0_i32_2 = arith.constant 0 : i32
    return %c0_i32, %c0_i32_0, %c0_i32_1 : i32, i32, i32
  }
  func.func @transform_2(%arg0: i32) -> (i32, i32) {
    %c0_i32 = arith.constant 0 : i32
    %c0_i32_0 = arith.constant 0 : i32
    %c0_i32_1 = arith.constant 0 : i32
    return %c0_i32, %c0_i32_0 : i32, i32
  }
  func.func @transform_3(%arg0: i32) -> (i32, i32, i32) {
    %c0_i32 = arith.constant 0 : i32
    %c0_i32_0 = arith.constant 0 : i32
    %c0_i32_1 = arith.constant 0 : i32
    %c0_i32_2 = arith.constant 0 : i32
    return %c0_i32, %c0_i32_0, %c0_i32_1 : i32, i32, i32
  }
  func.func @transform_4(%arg0: i32) -> (i32, i32, i32) {
    %c0_i32 = arith.constant 0 : i32
    %c0_i32_0 = arith.constant 0 : i32
    %c0_i32_1 = arith.constant 0 : i32
    %c0_i32_2 = arith.constant 0 : i32
    return %c0_i32, %c0_i32_0, %c0_i32_1 : i32, i32, i32
  }
  func.func @transform_5(%arg0: i32) -> (i32, i32) {
    %c0_i32 = arith.constant 0 : i32
    %c0_i32_0 = arith.constant 0 : i32
    %c0_i32_1 = arith.constant 0 : i32
    return %c0_i32, %c0_i32_0 : i32, i32
  }
  func.func @transform_6(%arg0: i32) -> (i32, i32, i32) {
    %c0_i32 = arith.constant 0 : i32
    %c0_i32_0 = arith.constant 0 : i32
    %c0_i32_1 = arith.constant 0 : i32
    %c0_i32_2 = arith.constant 0 : i32
    return %c0_i32, %c0_i32_0, %c0_i32_1 : i32, i32, i32
  }
  func.func @transform_7(%arg0: i32) -> (i32, i32, i32) {
    %c0_i32 = arith.constant 0 : i32
    %c0_i32_0 = arith.constant 0 : i32
    %c0_i32_1 = arith.constant 0 : i32
    %c0_i32_2 = arith.constant 0 : i32
    return %c0_i32, %c0_i32_0, %c0_i32_1 : i32, i32, i32
  }
  func.func @transform_8(%arg0: i32) -> (i32, i32) {
    %c0_i32 = arith.constant 0 : i32
    %c0_i32_0 = arith.constant 0 : i32
    %c0_i32_1 = arith.constant 0 : i32
    return %c0_i32, %c0_i32_0 : i32, i32
  }
  func.func @transform_9(%arg0: i32) -> (i32, i32, i32) {
    %c0_i32 = arith.constant 0 : i32
    %c0_i32_0 = arith.constant 0 : i32
    %c0_i32_1 = arith.constant 0 : i32
    %c0_i32_2 = arith.constant 0 : i32
    return %c0_i32, %c0_i32_0, %c0_i32_1 : i32, i32, i32
  }
  func.func @transform_10(%arg0: i32) -> (i32, i32, i32) {
    %c0_i32 = arith.constant 0 : i32
    %c0_i32_0 = arith.constant 0 : i32
    %c0_i32_1 = arith.constant 0 : i32
    return %arg0, %c0_i32, %c0_i32_0 : i32, i32, i32
  }
}

</mosaic_0001>

<llo_original>
// kernel: decode_forward.1
$region0: #{decode_forward.1}
  #allocation0 [shape = 'u32[]', space=smem, size = 0x4, offset = 0x4, fixed_abs, tag = 'smem constant byte address 0x4 - core index']
  #allocation1 [shape = 'u32[72,128]{1,0:T(1,128)}', space=vmem, size = 0x9000, scoped, tag = 'internal scratch']
  #allocation2 [shape = 'f32[1,1]{1,0:T(1,128)S(1)}', space=vmem, size = 0x200, scoped, tag = 'scoped memory for decode_forward.1']
  %s0 = inlined_call_operand.vmem [shape: f32[2,128,48], index: 0, kind: input, shape index: {}]
  %s1 = inlined_call_operand.vmem [shape: f32[3,128,128], index: 1, kind: input, shape index: {}]
  %s2 = inlined_call_operand.vmem [shape: f32[128,1], index: 2, kind: input, shape index: {}]
  %s3 = inlined_call_operand.vmem [shape: f32[3,48,56], index: 3, kind: input, shape index: {}]
  %s4 = inlined_call_operand.vmem [shape: f32[3,128,128], index: 4, kind: input, shape index: {}]
  %s5 = inlined_call_operand.vmem [shape: f32[128,1], index: 5, kind: input, shape index: {}]
  %s6 = inlined_call_operand.vmem [shape: f32[3,56,120], index: 6, kind: input, shape index: {}]
  %s7 = inlined_call_operand.vmem [shape: f32[3,1,128], index: 7, kind: input, shape index: {}]
  %s8 = inlined_call_operand.<no memory space> [shape: f32[1,1], index: 8, kind: input, shape index: {}]
  %s9 = inlined_call_operand.vmem [shape: f32[3,120,248], index: 9, kind: input, shape index: {}]
  %s10 = inlined_call_operand.vmem [shape: f32[2,1,248], index: 10, kind: output, shape index: {}]
  %s11 = sld [smem:[#allocation0]]
  $region73: #{decode_forward.1} parent=0
    _
  %s13 = ssub.s32 1, %s11
  %s14 = scalar_select 0, %s13, %s11
  %v15 = vstv %s8
  %16 = vst [vmem:[#allocation2] sm:$0x1] %v15
  loop: start=0, step=1, limit=4
  $region2: #{decode_forward.1} parent=0 // loop_pre_header
    _
  $region3: #{decode_forward.1} parent=0 // loop_header
    %s18 = sphi 0, %s22
    %p19 = scmp.ge.s32.totalorder %s18, 4
    %s28 = sphi 0, %s30
    %s31 = sphi 0, %s28
    %s32 = sphi 0, %s31
    %s48 = sphi 0, %s32
    %s52 = sphi 0, %s52
    %s54 = sphi 0, %s52
    %s55 = sphi 0, %s54
    %s69 = sphi 0, %s55
    %s73 = sphi 0, %s73
    %s75 = sphi 0, %s73
    %s76 = sphi 0, %s75
    %s90 = sphi 0, %s76
    %s94 = sphi 0, %s94
    %s96 = sphi 0, %s94
    %s97 = sphi 0, %s96
    %s111 = sphi 0, %s97
    %s115 = sphi 0, %s115
    %s117 = sphi 0, %s115
    %s118 = sphi 0, %s117
    %s132 = sphi 0, %s118
    %s136 = sphi 0, %s136
    %s138 = sphi 0, %s136
    %s139 = sphi 0, %s138
    %s153 = sphi 0, %s139
    %s157 = sphi 0, %s157
    %s159 = sphi 0, %s157
    %s160 = sphi 0, %s159
    %s174 = sphi 0, %s160
    %s178 = sphi 0, %s178
    %s180 = sphi 0, %s178
    %s181 = sphi 0, %s180
    %s195 = sphi 0, %s181
    %s199 = sphi 0, %s199
    %s201 = sphi 0, %s199
    %s202 = sphi 0, %s201
    %s216 = sphi 0, %s202
    %s220 = sphi 0, %s220
    %s222 = sphi 0, %s220
    %s223 = sphi 0, %s222
    %s237 = sphi 0, %s223
    %s243 = sphi 0, %s245
    %s246 = sphi 0, %s243
    %s247 = sphi 0, %s246
    %s263 = sphi 0, %s247
  $region4: #{decode_forward.1} parent=0 // loop_header_branch
    %21 = sbr.rel (%p19) target = $region8
  $region5: #{decode_forward.1} parent=0 // loop_body
    %s23 = ssub.s32 %s18, 1
    %s24 = ssub.s32 %s18, 2
    %s25 = sadd.s32 %s18, 1
    %s26 = ssub.s32 %s18, %s25
    %p27 = scmp.eq.s32.totalorder %s26, 0
    %s29 = sadd.s32 %s28, 1
    %s30 = scalar_select %p27, %s28, %s29
    %p33 = pneg %p27
    %p34 = scmp.eq.s32.totalorder %s18, 1
    %p35 = por %p33, %p34
    %p36 = scmp.ne.s32.totalorder %s28, %s31
    %p37 = scmp.eq.s32.totalorder %s18, 0
    %p38 = por %p36, %p37
    %p39 = scmp.ne.s32.totalorder %s28, %s31
    %p40 = scmp.eq.s32.totalorder %s23, 1
    %p41 = por %p39, %p40
    %p42 = scmp.ne.s32.totalorder %s31, %s32
    %p43 = scmp.eq.s32.totalorder %s23, 0
    %p44 = por %p42, %p43
    %p45 = scmp.ne.s32.totalorder %s31, %s32
    %p46 = scmp.eq.s32.totalorder %s24, 1
    %p47 = por %p45, %p46
    %p49 = scmp.ne.s32.totalorder %s32, %s48
    %p50 = scmp.eq.s32.totalorder %s24, 0
    %p51 = por %p49, %p50
    %s53 = sadd.s32 %s52, 1
    %p56 = scmp.eq.s32.totalorder %s18, 1
    %p57 = scmp.ne.s32.totalorder %s52, %s54
    %p58 = scmp.eq.s32.totalorder %s18, 0
    %p59 = por %p57, %p58
    %p60 = scmp.ne.s32.totalorder %s52, %s54
    %p61 = scmp.eq.s32.totalorder %s23, 1
    %p62 = por %p60, %p61
    %p63 = scmp.ne.s32.totalorder %s54, %s55
    %p64 = scmp.eq.s32.totalorder %s23, 0
    %p65 = por %p63, %p64
    %p66 = scmp.ne.s32.totalorder %s54, %s55
    %p67 = scmp.eq.s32.totalorder %s24, 1
    %p68 = por %p66, %p67
    %p70 = scmp.ne.s32.totalorder %s55, %s69
    %p71 = scmp.eq.s32.totalorder %s24, 0
    %p72 = por %p70, %p71
    %s74 = sadd.s32 %s73, 1
    %p77 = scmp.eq.s32.totalorder %s18, 1
    %p78 = scmp.ne.s32.totalorder %s73, %s75
    %p79 = scmp.eq.s32.totalorder %s18, 0
    %p80 = por %p78, %p79
    %p81 = scmp.ne.s32.totalorder %s73, %s75
    %p82 = scmp.eq.s32.totalorder %s23, 1
    %p83 = por %p81, %p82
    %p84 = scmp.ne.s32.totalorder %s75, %s76
    %p85 = scmp.eq.s32.totalorder %s23, 0
    %p86 = por %p84, %p85
    %p87 = scmp.ne.s32.totalorder %s75, %s76
    %p88 = scmp.eq.s32.totalorder %s24, 1
    %p89 = por %p87, %p88
    %p91 = scmp.ne.s32.totalorder %s76, %s90
    %p92 = scmp.eq.s32.totalorder %s24, 0
    %p93 = por %p91, %p92
    %s95 = sadd.s32 %s94, 1
    %p98 = scmp.eq.s32.totalorder %s18, 1
    %p99 = scmp.ne.s32.totalorder %s94, %s96
    %p100 = scmp.eq.s32.totalorder %s18, 0
    %p101 = por %p99, %p100
    %p102 = scmp.ne.s32.totalorder %s94, %s96
    %p103 = scmp.eq.s32.totalorder %s23, 1
    %p104 = por %p102, %p103
    %p105 = scmp.ne.s32.totalorder %s96, %s97
    %p106 = scmp.eq.s32.totalorder %s23, 0
    %p107 = por %p105, %p106
    %p108 = scmp.ne.s32.totalorder %s96, %s97
    %p109 = scmp.eq.s32.totalorder %s24, 1
    %p110 = por %p108, %p109
    %p112 = scmp.ne.s32.totalorder %s97, %s111
    %p113 = scmp.eq.s32.totalorder %s24, 0
    %p114 = por %p112, %p113
    %s116 = sadd.s32 %s115, 1
    %p119 = scmp.eq.s32.totalorder %s18, 1
    %p120 = scmp.ne.s32.totalorder %s115, %s117
    %p121 = scmp.eq.s32.totalorder %s18, 0
    %p122 = por %p120, %p121
    %p123 = scmp.ne.s32.totalorder %s115, %s117
    %p124 = scmp.eq.s32.totalorder %s23, 1
    %p125 = por %p123, %p124
    %p126 = scmp.ne.s32.totalorder %s117, %s118
    %p127 = scmp.eq.s32.totalorder %s23, 0
    %p128 = por %p126, %p127
    %p129 = scmp.ne.s32.totalorder %s117, %s118
    %p130 = scmp.eq.s32.totalorder %s24, 1
    %p131 = por %p129, %p130
    %p133 = scmp.ne.s32.totalorder %s118, %s132
    %p134 = scmp.eq.s32.totalorder %s24, 0
    %p135 = por %p133, %p134
    %s137 = sadd.s32 %s136, 1
    %p140 = scmp.eq.s32.totalorder %s18, 1
    %p141 = scmp.ne.s32.totalorder %s136, %s138
    %p142 = scmp.eq.s32.totalorder %s18, 0
    %p143 = por %p141, %p142
    %p144 = scmp.ne.s32.totalorder %s136, %s138
    %p145 = scmp.eq.s32.totalorder %s23, 1
    %p146 = por %p144, %p145
    %p147 = scmp.ne.s32.totalorder %s138, %s139
    %p148 = scmp.eq.s32.totalorder %s23, 0
    %p149 = por %p147, %p148
    %p150 = scmp.ne.s32.totalorder %s138, %s139
    %p151 = scmp.eq.s32.totalorder %s24, 1
    %p152 = por %p150, %p151
    %p154 = scmp.ne.s32.totalorder %s139, %s153
    %p155 = scmp.eq.s32.totalorder %s24, 0
    %p156 = por %p154, %p155
    %s158 = sadd.s32 %s157, 1
    %p161 = scmp.eq.s32.totalorder %s18, 1
    %p162 = scmp.ne.s32.totalorder %s157, %s159
    %p163 = scmp.eq.s32.totalorder %s18, 0
    %p164 = por %p162, %p163
    %p165 = scmp.ne.s32.totalorder %s157, %s159
    %p166 = scmp.eq.s32.totalorder %s23, 1
    %p167 = por %p165, %p166
    %p168 = scmp.ne.s32.totalorder %s159, %s160
    %p169 = scmp.eq.s32.totalorder %s23, 0
    %p170 = por %p168, %p169
    %p171 = scmp.ne.s32.totalorder %s159, %s160
    %p172 = scmp.eq.s32.totalorder %s24, 1
    %p173 = por %p171, %p172
    %p175 = scmp.ne.s32.totalorder %s160, %s174
    %p176 = scmp.eq.s32.totalorder %s24, 0
    %p177 = por %p175, %p176
    %s179 = sadd.s32 %s178, 1
    %p182 = scmp.eq.s32.totalorder %s18, 1
    %p183 = scmp.ne.s32.totalorder %s178, %s180
    %p184 = scmp.eq.s32.totalorder %s18, 0
    %p185 = por %p183, %p184
    %p186 = scmp.ne.s32.totalorder %s178, %s180
    %p187 = scmp.eq.s32.totalorder %s23, 1
    %p188 = por %p186, %p187
    %p189 = scmp.ne.s32.totalorder %s180, %s181
    %p190 = scmp.eq.s32.totalorder %s23, 0
    %p191 = por %p189, %p190
    %p192 = scmp.ne.s32.totalorder %s180, %s181
    %p193 = scmp.eq.s32.totalorder %s24, 1
    %p194 = por %p192, %p193
    %p196 = scmp.ne.s32.totalorder %s181, %s195
    %p197 = scmp.eq.s32.totalorder %s24, 0
    %p198 = por %p196, %p197
    %s200 = sadd.s32 %s199, 1
    %p203 = scmp.eq.s32.totalorder %s18, 1
    %p204 = scmp.ne.s32.totalorder %s199, %s201
    %p205 = scmp.eq.s32.totalorder %s18, 0
    %p206 = por %p204, %p205
    %p207 = scmp.ne.s32.totalorder %s199, %s201
    %p208 = scmp.eq.s32.totalorder %s23, 1
    %p209 = por %p207, %p208
    %p210 = scmp.ne.s32.totalorder %s201, %s202
    %p211 = scmp.eq.s32.totalorder %s23, 0
    %p212 = por %p210, %p211
    %p213 = scmp.ne.s32.totalorder %s201, %s202
    %p214 = scmp.eq.s32.totalorder %s24, 1
    %p215 = por %p213, %p214
    %p217 = scmp.ne.s32.totalorder %s202, %s216
    %p218 = scmp.eq.s32.totalorder %s24, 0
    %p219 = por %p217, %p218
    %s221 = sadd.s32 %s220, 1
    %p224 = scmp.eq.s32.totalorder %s18, 1
    %p225 = scmp.ne.s32.totalorder %s220, %s222
    %p226 = scmp.eq.s32.totalorder %s18, 0
    %p227 = por %p225, %p226
    %p228 = scmp.ne.s32.totalorder %s220, %s222
    %p229 = scmp.eq.s32.totalorder %s23, 1
    %p230 = por %p228, %p229
    %p231 = scmp.ne.s32.totalorder %s222, %s223
    %p232 = scmp.eq.s32.totalorder %s23, 0
    %p233 = por %p231, %p232
    %p234 = scmp.ne.s32.totalorder %s222, %s223
    %p235 = scmp.eq.s32.totalorder %s24, 1
    %p236 = por %p234, %p235
    %p238 = scmp.ne.s32.totalorder %s223, %s237
    %p239 = scmp.eq.s32.totalorder %s24, 0
    %p240 = por %p238, %p239
    %s241 = ssub.s32 %s18, %s25
    %p242 = scmp.eq.s32.totalorder %s241, 0
    %s244 = sadd.s32 %s243, 1
    %s245 = scalar_select %p242, %s243, %s244
    %p248 = pneg %p242
    %p249 = scmp.eq.s32.totalorder %s18, 1
    %p250 = por %p248, %p249
    %p251 = scmp.ne.s32.totalorder %s243, %s246
    %p252 = scmp.eq.s32.totalorder %s18, 0
    %p253 = por %p251, %p252
    %p254 = scmp.ne.s32.totalorder %s243, %s246
    %p255 = scmp.eq.s32.totalorder %s23, 1
    %p256 = por %p254, %p255
    %p257 = scmp.ne.s32.totalorder %s246, %s247
    %p258 = scmp.eq.s32.totalorder %s23, 0
    %p259 = por %p257, %p258
    %p260 = scmp.ne.s32.totalorder %s246, %s247
    %p261 = scmp.eq.s32.totalorder %s24, 1
    %p262 = por %p260, %p261
    %p264 = scmp.ne.s32.totalorder %s247, %s263
    %p265 = scmp.eq.s32.totalorder %s24, 0
    %p266 = por %p264, %p265
    %p267 = scmp.le.s32.totalorder 1, %s18
    %p268 = scmp.lt.s32.totalorder %s18, 3
    %p269 = pnand %p267, %p268
    %p270 = pneg %p269
    // Predicated region
    $region9: #{decode_forward.1} parent=5 // pred_check
      _
    $region10: #{decode_forward.1} parent=5 // pred_check_branch
      %272 = sbr.rel (%p269) target = $region12
    $region11: #{decode_forward.1} parent=5 // pred_region
      %s273 = ssub.s32 %s18, 1
      // Predicated region
      $region13: #{decode_forward.1} parent=11 // pred_check
        %p274 = pneg %p65
      $region14: #{decode_forward.1} parent=11 // pred_check_branch
        %276 = sbr.rel (%p274) target = $region16
      $region15: #{decode_forward.1} parent=11 // pred_region
        _
      $region16: #{decode_forward.1} parent=11 // pred_fallthru
        _
      // Predicated region
      $region17: #{decode_forward.1} parent=11 // pred_check
        %p277 = pneg %p86
      $region18: #{decode_forward.1} parent=11 // pred_check_branch
        %279 = sbr.rel (%p277) target = $region20
      $region19: #{decode_forward.1} parent=11 // pred_region
        _
      $region20: #{decode_forward.1} parent=11 // pred_fallthru
        _
      // Predicated region
      $region21: #{decode_forward.1} parent=11 // pred_check
        %p280 = pneg %p107
      $region22: #{decode_forward.1} parent=11 // pred_check_branch
        %282 = sbr.rel (%p280) target = $region24
      $region23: #{decode_forward.1} parent=11 // pred_region
        _
      $region24: #{decode_forward.1} parent=11 // pred_fallthru
        _
      // Predicated region
      $region25: #{decode_forward.1} parent=11 // pred_check
        %p283 = pneg %p128
      $region26: #{decode_forward.1} parent=11 // pred_check_branch
        %285 = sbr.rel (%p283) target = $region28
      $region27: #{decode_forward.1} parent=11 // pred_region
        _
      $region28: #{decode_forward.1} parent=11 // pred_fallthru
        _
      // Predicated region
      $region29: #{decode_forward.1} parent=11 // pred_check
        %p286 = pneg %p149
      $region30: #{decode_forward.1} parent=11 // pred_check_branch
        %288 = sbr.rel (%p286) target = $region32
      $region31: #{decode_forward.1} parent=11 // pred_region
        _
      $region32: #{decode_forward.1} parent=11 // pred_fallthru
        _
      // Predicated region
      $region33: #{decode_forward.1} parent=11 // pred_check
        %p289 = pneg %p170
      $region34: #{decode_forward.1} parent=11 // pred_check_branch
        %291 = sbr.rel (%p289) target = $region36
      $region35: #{decode_forward.1} parent=11 // pred_region
        _
      $region36: #{decode_forward.1} parent=11 // pred_fallthru
        _
      // Predicated region
      $region37: #{decode_forward.1} parent=11 // pred_check
        %p292 = pneg %p191
      $region38: #{decode_forward.1} parent=11 // pred_check_branch
        %294 = sbr.rel (%p292) target = $region40
      $region39: #{decode_forward.1} parent=11 // pred_region
        _
      $region40: #{decode_forward.1} parent=11 // pred_fallthru
        _
      // Predicated region
      $region41: #{decode_forward.1} parent=11 // pred_check
        %p295 = pneg %p212
      $region42: #{decode_forward.1} parent=11 // pred_check_branch
        %297 = sbr.rel (%p295) target = $region44
      $region43: #{decode_forward.1} parent=11 // pred_region
        _
      $region44: #{decode_forward.1} parent=11 // pred_fallthru
        _
      // Predicated region
      $region45: #{decode_forward.1} parent=11 // pred_check
        %p298 = pneg %p233
      $region46: #{decode_forward.1} parent=11 // pred_check_branch
        %300 = sbr.rel (%p298) target = $region48
      $region47: #{decode_forward.1} parent=11 // pred_region
        _
      $region48: #{decode_forward.1} parent=11 // pred_fallthru
        _
    $region12: #{decode_forward.1} parent=5 // pred_fallthru
      _
    %p301 = scmp.lt.s32.totalorder %s18, 2
    // Predicated region
    $region49: #{decode_forward.1} parent=5 // pred_check
      %p302 = pneg %p301
    $region50: #{decode_forward.1} parent=5 // pred_check_branch
      %304 = sbr.rel (%p302) target = $region52
    $region51: #{decode_forward.1} parent=5 // pred_region
      // Predicated region
      $region53: #{decode_forward.1} parent=51 // pred_check
        %p305 = pneg %p38
      $region54: #{decode_forward.1} parent=51 // pred_check_branch
        %307 = sbr.rel (%p305) target = $region56
      $region55: #{decode_forward.1} parent=51 // pred_region
        %p308 = scmp.lt.s32.totalorder %s18, 1
        %s309 = scalar_select %p308, %s18, 1
        %s310 = smul.addr %s309, 16
        %s311 = smul.addr %s310, 8
        %s312 = scalar_lea.vmem %s0, %s311
      $region56: #{decode_forward.1} parent=51 // pred_fallthru
        _
    $region52: #{decode_forward.1} parent=5 // pred_fallthru
      _
    %p313 = scmp.le.s32.totalorder 1, %s18
    %p314 = scmp.lt.s32.totalorder %s18, 3
    %p315 = pnand %p313, %p314
    %p316 = pneg %p315
    // Predicated region
    $region57: #{decode_forward.1} parent=5 // pred_check
      _
    $region58: #{decode_forward.1} parent=5 // pred_check_branch
      %318 = sbr.rel (%p315) target = $region60
    $region59: #{decode_forward.1} parent=5 // pred_region
      %s319 = ssub.s32 %s18, 1
      %p320 = scmp.lt.s32.totalorder %s23, 1
      %s321 = scalar_select %p320, %s23, 1
      %s322 = smul.addr %s321, 16
      %s323 = smul.addr %s322, 8
      %s324 = scalar_lea.vmem %s0, %s323
      %p325 = pneg %p44
      %p326 = pneg %p41
      %p327 = pneg %p65
      %p328 = pneg %p62
      %p329 = pneg %p86
      %p330 = pneg %p83
      %p331 = pneg %p107
      %p332 = pneg %p104
      %p333 = pneg %p128
      %p334 = pneg %p125
      %p335 = pneg %p149
      %p336 = pneg %p146
      %p337 = pneg %p170
      %p338 = pneg %p167
      %p339 = pneg %p191
      %p340 = pneg %p188
      %p341 = pneg %p212
      %p342 = pneg %p209
      %p343 = pneg %p233
      %p344 = pneg %p230
      %p345 = pneg %p259
      %p346 = pneg %p256
      %p347 = scmp.lt.s32.totalorder %s23, 1
      %s348 = scalar_select %p347, %s23, 1
      %s349 = smul.addr %s348, 2
      %s350 = scalar_lea.vmem %s10, %s349
      %p351 = scmp.lt.s32.totalorder %s23, 1
      %s352 = scalar_select %p351, %s23, 1
      %s353 = smul.addr %s352, 16
      %s354 = smul.addr %s353, 8
      %s355 = scalar_lea.vmem %s0, %s354
      %p356 = scmp.lt.s32.totalorder %s23, 1
      %s357 = scalar_select %p356, %s23, 1
      %s358 = smul.addr %s357, 2
      %s359 = scalar_lea.vmem %s10, %s358
      %v360 = vld [vmem:[%s355] sm:$0xff]
      %v361 = vld [vmem:[%s355 + $0x8] sm:$0xff]
      %v362 = vld [vmem:[%s355 + $0x10] sm:$0xff]
      %v363 = vld [vmem:[%s355 + $0x18] sm:$0xff]
      %v364 = vld [vmem:[%s355 + $0x20] sm:$0xff]
      %v365 = vld [vmem:[%s355 + $0x28] sm:$0xff]
      %v366 = vld [vmem:[%s355 + $0x30] sm:$0xff]
      %v367 = vld [vmem:[%s355 + $0x38] sm:$0xff]
      %v368 = vld [vmem:[%s355 + $0x40] sm:$0xff]
      %v369 = vld [vmem:[%s355 + $0x48] sm:$0xff]
      %v370 = vld [vmem:[%s355 + $0x50] sm:$0xff]
      %v371 = vld [vmem:[%s355 + $0x58] sm:$0xff]
      %v372 = vld [vmem:[%s355 + $0x60] sm:$0xff]
      %v373 = vld [vmem:[%s355 + $0x68] sm:$0xff]
      %v374 = vld [vmem:[%s355 + $0x70] sm:$0xff]
      %v375 = vld [vmem:[%s355 + $0x78] sm:$0xff]
      %v376 = vld [vmem:[%s2] sm:$0xff]
      %v377 = vld [vmem:[%s2 + $0x8] sm:$0xff]
      %v378 = vld [vmem:[%s2 + $0x10] sm:$0xff]
      %v379 = vld [vmem:[%s2 + $0x18] sm:$0xff]
      %v380 = vld [vmem:[%s2 + $0x20] sm:$0xff]
      %v381 = vld [vmem:[%s2 + $0x28] sm:$0xff]
      %v382 = vld [vmem:[%s2 + $0x30] sm:$0xff]
      %v383 = vld [vmem:[%s2 + $0x38] sm:$0xff]
      %v384 = vld [vmem:[%s2 + $0x40] sm:$0xff]
      %v385 = vld [vmem:[%s2 + $0x48] sm:$0xff]
      %v386 = vld [vmem:[%s2 + $0x50] sm:$0xff]
      %v387 = vld [vmem:[%s2 + $0x58] sm:$0xff]
      %v388 = vld [vmem:[%s2 + $0x60] sm:$0xff]
      %v389 = vld [vmem:[%s2 + $0x68] sm:$0xff]
      %v390 = vld [vmem:[%s2 + $0x70] sm:$0xff]
      %v391 = vld [vmem:[%s2 + $0x78] sm:$0xff]
      %v392 = vld [vmem:[%s1] sm:$0xff]
      %v393 = vld [vmem:[%s1 + $0x8] sm:$0xff]
      %v394 = vld [vmem:[%s1 + $0x10] sm:$0xff]
      %v395 = vld [vmem:[%s1 + $0x18] sm:$0xff]
      %v396 = vld [vmem:[%s1 + $0x20] sm:$0xff]
      %v397 = vld [vmem:[%s1 + $0x28] sm:$0xff]
      %v398 = vld [vmem:[%s1 + $0x30] sm:$0xff]
      %v399 = vld [vmem:[%s1 + $0x38] sm:$0xff]
      %v400 = vld [vmem:[%s1 + $0x40] sm:$0xff]
      %v401 = vld [vmem:[%s1 + $0x48] sm:$0xff]
      %v402 = vld [vmem:[%s1 + $0x50] sm:$0xff]
      %v403 = vld [vmem:[%s1 + $0x58] sm:$0xff]
      %v404 = vld [vmem:[%s1 + $0x60] sm:$0xff]
      %v405 = vld [vmem:[%s1 + $0x68] sm:$0xff]
      %v406 = vld [vmem:[%s1 + $0x70] sm:$0xff]
      %v407 = vld [vmem:[%s1 + $0x78] sm:$0xff]
      %408 = vmatpush.msra.mxu0 %v375
      %409 = vmatpush.msra.mxu0 %v374
      %410 = vmatpush.msra.mxu0 %v373
      %411 = vmatpush.msra.mxu0 %v372
      %412 = vmatpush.msra.mxu0 %v371
      %413 = vmatpush.msra.mxu0 %v370
      %414 = vmatpush.msra.mxu0 %v369
      %415 = vmatpush.msra.mxu0 %v368
      %416 = vmatpush.msra.mxu0 %v367
      %417 = vmatpush.msra.mxu0 %v366
      %418 = vmatpush.msra.mxu0 %v365
      %419 = vmatpush.msra.mxu0 %v364
      %420 = vmatpush.msra.mxu0 %v363
      %421 = vmatpush.msra.mxu0 %v362
      %422 = vmatpush.msra.mxu0 %v361
      %423 = vmatpush.msra.mxu0 %v360
      %424 = vmatmul.f32.gmra.mxu0 %v392
      %v425 = vpop.f32.mrf.mxu0
      %v426 = vadd.f32 0.0, %v425
      %427 = vmatmul.f32.gmra.mxu0 %v393
      %v428 = vpop.f32.mrf.mxu0
      %v429 = vadd.f32 0.0, %v428
      %430 = vmatmul.f32.gmra.mxu0 %v394
      %v431 = vpop.f32.mrf.mxu0
      %v432 = vadd.f32 0.0, %v431
      %433 = vmatmul.f32.gmra.mxu0 %v395
      %v434 = vpop.f32.mrf.mxu0
      %v435 = vadd.f32 0.0, %v434
      %436 = vmatmul.f32.gmra.mxu0 %v396
      %v437 = vpop.f32.mrf.mxu0
      %v438 = vadd.f32 0.0, %v437
      %439 = vmatmul.f32.gmra.mxu0 %v397
      %v440 = vpop.f32.mrf.mxu0
      %v441 = vadd.f32 0.0, %v440
      %442 = vmatmul.f32.gmra.mxu0 %v398
      %v443 = vpop.f32.mrf.mxu0
      %v444 = vadd.f32 0.0, %v443
      %445 = vmatmul.f32.gmra.mxu0 %v399
      %v446 = vpop.f32.mrf.mxu0
      %v447 = vadd.f32 0.0, %v446
      %448 = vmatmul.f32.gmra.mxu0 %v400
      %v449 = vpop.f32.mrf.mxu0
      %v450 = vadd.f32 0.0, %v449
      %451 = vmatmul.f32.gmra.mxu0 %v401
      %v452 = vpop.f32.mrf.mxu0
      %v453 = vadd.f32 0.0, %v452
      %454 = vmatmul.f32.gmra.mxu0 %v402
      %v455 = vpop.f32.mrf.mxu0
      %v456 = vadd.f32 0.0, %v455
      %457 = vmatmul.f32.gmra.mxu0 %v403
      %v458 = vpop.f32.mrf.mxu0
      %v459 = vadd.f32 0.0, %v458
      %460 = vmatmul.f32.gmra.mxu0 %v404
      %v461 = vpop.f32.mrf.mxu0
      %v462 = vadd.f32 0.0, %v461
      %463 = vmatmul.f32.gmra.mxu0 %v405
      %v464 = vpop.f32.mrf.mxu0
      %v465 = vadd.f32 0.0, %v464
      %466 = vmatmul.f32.gmra.mxu0 %v406
      %v467 = vpop.f32.mrf.mxu0
      %v468 = vadd.f32 0.0, %v467
      %469 = vmatmul.f32.gmra.mxu0 %v407
      %v470 = vpop.f32.mrf.mxu0
      %v471 = vadd.f32 0.0, %v470
      %472 = vdwg.mxu0
      %v473 = vld [vmem:[%s3] sm:$0xff]
      %v474 = vld [vmem:[%s3 + $0x8] sm:$0xff]
      %v475 = vld [vmem:[%s3 + $0x10] sm:$0xff]
      %v476 = vld [vmem:[%s3 + $0x18] sm:$0xff]
      %v477 = vld [vmem:[%s3 + $0x20] sm:$0xff]
      %v478 = vld [vmem:[%s3 + $0x28] sm:$0xff]
      %vm479 = vcmask 392192
      %v481 = vsel %vm479, %v426, 0
      %v484 = vsel %vm479, %v429, 0
      %v487 = vsel %vm479, %v432, 0
      %v490 = vsel %vm479, %v435, 0
      %v493 = vsel %vm479, %v438, 0
      %v496 = vsel %vm479, %v441, 0
      %v499 = vsel %vm479, %v444, 0
      %v502 = vsel %vm479, %v447, 0
      %v505 = vsel %vm479, %v450, 0
      %v508 = vsel %vm479, %v453, 0
      %v511 = vsel %vm479, %v456, 0
      %v514 = vsel %vm479, %v459, 0
      %v517 = vsel %vm479, %v462, 0
      %v520 = vsel %vm479, %v465, 0
      %v523 = vsel %vm479, %v468, 0
      %v526 = vsel %vm479, %v471, 0
      %528 = vmatpush.msra.mxu0 0.0
      %529 = vmatpush.msra.mxu0 0.0
      %530 = vmatpush.msra.mxu0 0.0
      %531 = vmatpush.msra.mxu0 0.0
      %532 = vmatpush.msra.mxu0 0.0
      %533 = vmatpush.msra.mxu0 0.0
      %534 = vmatpush.msra.mxu0 0.0
      %535 = vmatpush.msra.mxu0 0.0
      %536 = vmatpush.msra.mxu0 0.0
      %537 = vmatpush.msra.mxu0 0.0
      %538 = vmatpush.msra.mxu0 %v478
      %539 = vmatpush.msra.mxu0 %v477
      %540 = vmatpush.msra.mxu0 %v476
      %541 = vmatpush.msra.mxu0 %v475
      %542 = vmatpush.msra.mxu0 %v474
      %543 = vmatpush.msra.mxu0 %v473
      %544 = vmatmul.f32.gmra.mxu0 %v481
      %v545 = vpop.f32.mrf.mxu0
      %v546 = vadd.f32 0.0, %v545
      %547 = vmatmul.f32.gmra.mxu0 %v484
      %v548 = vpop.f32.mrf.mxu0
      %v549 = vadd.f32 0.0, %v548
      %550 = vmatmul.f32.gmra.mxu0 %v487
      %v551 = vpop.f32.mrf.mxu0
      %v552 = vadd.f32 0.0, %v551
      %553 = vmatmul.f32.gmra.mxu0 %v490
      %v554 = vpop.f32.mrf.mxu0
      %v555 = vadd.f32 0.0, %v554
      %556 = vmatmul.f32.gmra.mxu0 %v493
      %v557 = vpop.f32.mrf.mxu0
      %v558 = vadd.f32 0.0, %v557
      %559 = vmatmul.f32.gmra.mxu0 %v496
      %v560 = vpop.f32.mrf.mxu0
      %v561 = vadd.f32 0.0, %v560
      %562 = vmatmul.f32.gmra.mxu0 %v499
      %v563 = vpop.f32.mrf.mxu0
      %v564 = vadd.f32 0.0, %v563
      %565 = vmatmul.f32.gmra.mxu0 %v502
      %v566 = vpop.f32.mrf.mxu0
      %v567 = vadd.f32 0.0, %v566
      %568 = vmatmul.f32.gmra.mxu0 %v505
      %v569 = vpop.f32.mrf.mxu0
      %v570 = vadd.f32 0.0, %v569
      %571 = vmatmul.f32.gmra.mxu0 %v508
      %v572 = vpop.f32.mrf.mxu0
      %v573 = vadd.f32 0.0, %v572
      %574 = vmatmul.f32.gmra.mxu0 %v511
      %v575 = vpop.f32.mrf.mxu0
      %v576 = vadd.f32 0.0, %v575
      %577 = vmatmul.f32.gmra.mxu0 %v514
      %v578 = vpop.f32.mrf.mxu0
      %v579 = vadd.f32 0.0, %v578
      %580 = vmatmul.f32.gmra.mxu0 %v517
      %v581 = vpop.f32.mrf.mxu0
      %v582 = vadd.f32 0.0, %v581
      %583 = vmatmul.f32.gmra.mxu0 %v520
      %v584 = vpop.f32.mrf.mxu0
      %v585 = vadd.f32 0.0, %v584
      %586 = vmatmul.f32.gmra.mxu0 %v523
      %v587 = vpop.f32.mrf.mxu0
      %v588 = vadd.f32 0.0, %v587
      %589 = vmatmul.f32.gmra.mxu0 %v526
      %v590 = vpop.f32.mrf.mxu0
      %v591 = vadd.f32 0.0, %v590
      %592 = vdwg.mxu0
      %594 = vset.pattern.permute.xlu0 0
      %595 = vperm.xlu0 %594, %v376
      %v596 = vpop.permute.xlu0 %595
      %599 = vset.pattern.permute.xlu0 0
      %600 = vperm.xlu0 %599, %v377
      %v601 = vpop.permute.xlu0 %600
      %604 = vset.pattern.permute.xlu0 0
      %605 = vperm.xlu0 %604, %v378
      %v606 = vpop.permute.xlu0 %605
      %609 = vset.pattern.permute.xlu0 0
      %610 = vperm.xlu0 %609, %v379
      %v611 = vpop.permute.xlu0 %610
      %614 = vset.pattern.permute.xlu0 0
      %615 = vperm.xlu0 %614, %v380
      %v616 = vpop.permute.xlu0 %615
      %619 = vset.pattern.permute.xlu0 0
      %620 = vperm.xlu0 %619, %v381
      %v621 = vpop.permute.xlu0 %620
      %624 = vset.pattern.permute.xlu0 0
      %625 = vperm.xlu0 %624, %v382
      %v626 = vpop.permute.xlu0 %625
      %629 = vset.pattern.permute.xlu0 0
      %630 = vperm.xlu0 %629, %v383
      %v631 = vpop.permute.xlu0 %630
      %634 = vset.pattern.permute.xlu0 0
      %635 = vperm.xlu0 %634, %v384
      %v636 = vpop.permute.xlu0 %635
      %639 = vset.pattern.permute.xlu0 0
      %640 = vperm.xlu0 %639, %v385
      %v641 = vpop.permute.xlu0 %640
      %644 = vset.pattern.permute.xlu0 0
      %645 = vperm.xlu0 %644, %v386
      %v646 = vpop.permute.xlu0 %645
      %649 = vset.pattern.permute.xlu0 0
      %650 = vperm.xlu0 %649, %v387
      %v651 = vpop.permute.xlu0 %650
      %654 = vset.pattern.permute.xlu0 0
      %655 = vperm.xlu0 %654, %v388
      %v656 = vpop.permute.xlu0 %655
      %659 = vset.pattern.permute.xlu0 0
      %660 = vperm.xlu0 %659, %v389
      %v661 = vpop.permute.xlu0 %660
      %664 = vset.pattern.permute.xlu0 0
      %665 = vperm.xlu0 %664, %v390
      %v666 = vpop.permute.xlu0 %665
      %669 = vset.pattern.permute.xlu0 0
      %670 = vperm.xlu0 %669, %v391
      %v671 = vpop.permute.xlu0 %670
      %v673 = vadd.f32 %v596, %v546
      %v674 = vadd.f32 %v601, %v549
      %v675 = vadd.f32 %v606, %v552
      %v676 = vadd.f32 %v611, %v555
      %v677 = vadd.f32 %v616, %v558
      %v678 = vadd.f32 %v621, %v561
      %v679 = vadd.f32 %v626, %v564
      %v680 = vadd.f32 %v631, %v567
      %v681 = vadd.f32 %v636, %v570
      %v682 = vadd.f32 %v641, %v573
      %v683 = vadd.f32 %v646, %v576
      %v684 = vadd.f32 %v651, %v579
      %v685 = vadd.f32 %v656, %v582
      %v686 = vadd.f32 %v661, %v585
      %v687 = vadd.f32 %v666, %v588
      %v688 = vadd.f32 %v671, %v591
      %s689 = scalar_lea.vmem %s1, 128
      %v690 = vld [vmem:[%s689] sm:$0xff]
      %v691 = vld [vmem:[%s689 + $0x8] sm:$0xff]
      %v692 = vld [vmem:[%s689 + $0x10] sm:$0xff]
      %v693 = vld [vmem:[%s689 + $0x18] sm:$0xff]
      %v694 = vld [vmem:[%s689 + $0x20] sm:$0xff]
      %v695 = vld [vmem:[%s689 + $0x28] sm:$0xff]
      %v696 = vld [vmem:[%s689 + $0x30] sm:$0xff]
      %v697 = vld [vmem:[%s689 + $0x38] sm:$0xff]
      %v698 = vld [vmem:[%s689 + $0x40] sm:$0xff]
      %v699 = vld [vmem:[%s689 + $0x48] sm:$0xff]
      %v700 = vld [vmem:[%s689 + $0x50] sm:$0xff]
      %v701 = vld [vmem:[%s689 + $0x58] sm:$0xff]
      %v702 = vld [vmem:[%s689 + $0x60] sm:$0xff]
      %v703 = vld [vmem:[%s689 + $0x68] sm:$0xff]
      %v704 = vld [vmem:[%s689 + $0x70] sm:$0xff]
      %v705 = vld [vmem:[%s689 + $0x78] sm:$0xff]
      %706 = vmatpush.msra.mxu0 %v375
      %707 = vmatpush.msra.mxu0 %v374
      %708 = vmatpush.msra.mxu0 %v373
      %709 = vmatpush.msra.mxu0 %v372
      %710 = vmatpush.msra.mxu0 %v371
      %711 = vmatpush.msra.mxu0 %v370
      %712 = vmatpush.msra.mxu0 %v369
      %713 = vmatpush.msra.mxu0 %v368
      %714 = vmatpush.msra.mxu0 %v367
      %715 = vmatpush.msra.mxu0 %v366
      %716 = vmatpush.msra.mxu0 %v365
      %717 = vmatpush.msra.mxu0 %v364
      %718 = vmatpush.msra.mxu0 %v363
      %719 = vmatpush.msra.mxu0 %v362
      %720 = vmatpush.msra.mxu0 %v361
      %721 = vmatpush.msra.mxu0 %v360
      %722 = vmatmul.f32.gmra.mxu0 %v690
      %v723 = vpop.f32.mrf.mxu0
      %v724 = vadd.f32 0.0, %v723
      %725 = vmatmul.f32.gmra.mxu0 %v691
      %v726 = vpop.f32.mrf.mxu0
      %v727 = vadd.f32 0.0, %v726
      %728 = vmatmul.f32.gmra.mxu0 %v692
      %v729 = vpop.f32.mrf.mxu0
      %v730 = vadd.f32 0.0, %v729
      %731 = vmatmul.f32.gmra.mxu0 %v693
      %v732 = vpop.f32.mrf.mxu0
      %v733 = vadd.f32 0.0, %v732
      %734 = vmatmul.f32.gmra.mxu0 %v694
      %v735 = vpop.f32.mrf.mxu0
      %v736 = vadd.f32 0.0, %v735
      %737 = vmatmul.f32.gmra.mxu0 %v695
      %v738 = vpop.f32.mrf.mxu0
      %v739 = vadd.f32 0.0, %v738
      %740 = vmatmul.f32.gmra.mxu0 %v696
      %v741 = vpop.f32.mrf.mxu0
      %v742 = vadd.f32 0.0, %v741
      %743 = vmatmul.f32.gmra.mxu0 %v697
      %v744 = vpop.f32.mrf.mxu0
      %v745 = vadd.f32 0.0, %v744
      %746 = vmatmul.f32.gmra.mxu0 %v698
      %v747 = vpop.f32.mrf.mxu0
      %v748 = vadd.f32 0.0, %v747
      %749 = vmatmul.f32.gmra.mxu0 %v699
      %v750 = vpop.f32.mrf.mxu0
      %v751 = vadd.f32 0.0, %v750
      %752 = vmatmul.f32.gmra.mxu0 %v700
      %v753 = vpop.f32.mrf.mxu0
      %v754 = vadd.f32 0.0, %v753
      %755 = vmatmul.f32.gmra.mxu0 %v701
      %v756 = vpop.f32.mrf.mxu0
      %v757 = vadd.f32 0.0, %v756
      %758 = vmatmul.f32.gmra.mxu0 %v702
      %v759 = vpop.f32.mrf.mxu0
      %v760 = vadd.f32 0.0, %v759
      %761 = vmatmul.f32.gmra.mxu0 %v703
      %v762 = vpop.f32.mrf.mxu0
      %v763 = vadd.f32 0.0, %v762
      %764 = vmatmul.f32.gmra.mxu0 %v704
      %v765 = vpop.f32.mrf.mxu0
      %v766 = vadd.f32 0.0, %v765
      %767 = vmatmul.f32.gmra.mxu0 %v705
      %v768 = vpop.f32.mrf.mxu0
      %v769 = vadd.f32 0.0, %v768
      %770 = vdwg.mxu0
      %s771 = scalar_lea.vmem %s3, 48
      %v772 = vld [vmem:[%s771] sm:$0xff]
      %v773 = vld [vmem:[%s771 + $0x8] sm:$0xff]
      %v774 = vld [vmem:[%s771 + $0x10] sm:$0xff]
      %v775 = vld [vmem:[%s771 + $0x18] sm:$0xff]
      %v776 = vld [vmem:[%s771 + $0x20] sm:$0xff]
      %v777 = vld [vmem:[%s771 + $0x28] sm:$0xff]
      %v779 = vsel %vm479, %v724, 0
      %v782 = vsel %vm479, %v727, 0
      %v785 = vsel %vm479, %v730, 0
      %v788 = vsel %vm479, %v733, 0
      %v791 = vsel %vm479, %v736, 0
      %v794 = vsel %vm479, %v739, 0
      %v797 = vsel %vm479, %v742, 0
      %v800 = vsel %vm479, %v745, 0
      %v803 = vsel %vm479, %v748, 0
      %v806 = vsel %vm479, %v751, 0
      %v809 = vsel %vm479, %v754, 0
      %v812 = vsel %vm479, %v757, 0
      %v815 = vsel %vm479, %v760, 0
      %v818 = vsel %vm479, %v763, 0
      %v821 = vsel %vm479, %v766, 0
      %v824 = vsel %vm479, %v769, 0
      %826 = vmatpush.msra.mxu0 0.0
      %827 = vmatpush.msra.mxu0 0.0
      %828 = vmatpush.msra.mxu0 0.0
      %829 = vmatpush.msra.mxu0 0.0
      %830 = vmatpush.msra.mxu0 0.0
      %831 = vmatpush.msra.mxu0 0.0
      %832 = vmatpush.msra.mxu0 0.0
      %833 = vmatpush.msra.mxu0 0.0
      %834 = vmatpush.msra.mxu0 0.0
      %835 = vmatpush.msra.mxu0 0.0
      %836 = vmatpush.msra.mxu0 %v777
      %837 = vmatpush.msra.mxu0 %v776
      %838 = vmatpush.msra.mxu0 %v775
      %839 = vmatpush.msra.mxu0 %v774
      %840 = vmatpush.msra.mxu0 %v773
      %841 = vmatpush.msra.mxu0 %v772
      %842 = vmatmul.f32.gmra.mxu0 %v779
      %v843 = vpop.f32.mrf.mxu0
      %v844 = vadd.f32 0.0, %v843
      %845 = vmatmul.f32.gmra.mxu0 %v782
      %v846 = vpop.f32.mrf.mxu0
      %v847 = vadd.f32 0.0, %v846
      %848 = vmatmul.f32.gmra.mxu0 %v785
      %v849 = vpop.f32.mrf.mxu0
      %v850 = vadd.f32 0.0, %v849
      %851 = vmatmul.f32.gmra.mxu0 %v788
      %v852 = vpop.f32.mrf.mxu0
      %v853 = vadd.f32 0.0, %v852
      %854 = vmatmul.f32.gmra.mxu0 %v791
      %v855 = vpop.f32.mrf.mxu0
      %v856 = vadd.f32 0.0, %v855
      %857 = vmatmul.f32.gmra.mxu0 %v794
      %v858 = vpop.f32.mrf.mxu0
      %v859 = vadd.f32 0.0, %v858
      %860 = vmatmul.f32.gmra.mxu0 %v797
      %v861 = vpop.f32.mrf.mxu0
      %v862 = vadd.f32 0.0, %v861
      %863 = vmatmul.f32.gmra.mxu0 %v800
      %v864 = vpop.f32.mrf.mxu0
      %v865 = vadd.f32 0.0, %v864
      %866 = vmatmul.f32.gmra.mxu0 %v803
      %v867 = vpop.f32.mrf.mxu0
      %v868 = vadd.f32 0.0, %v867
      %869 = vmatmul.f32.gmra.mxu0 %v806
      %v870 = vpop.f32.mrf.mxu0
      %v871 = vadd.f32 0.0, %v870
      %872 = vmatmul.f32.gmra.mxu0 %v809
      %v873 = vpop.f32.mrf.mxu0
      %v874 = vadd.f32 0.0, %v873
      %875 = vmatmul.f32.gmra.mxu0 %v812
      %v876 = vpop.f32.mrf.mxu0
      %v877 = vadd.f32 0.0, %v876
      %878 = vmatmul.f32.gmra.mxu0 %v815
      %v879 = vpop.f32.mrf.mxu0
      %v880 = vadd.f32 0.0, %v879
      %881 = vmatmul.f32.gmra.mxu0 %v818
      %v882 = vpop.f32.mrf.mxu0
      %v883 = vadd.f32 0.0, %v882
      %884 = vmatmul.f32.gmra.mxu0 %v821
      %v885 = vpop.f32.mrf.mxu0
      %v886 = vadd.f32 0.0, %v885
      %887 = vmatmul.f32.gmra.mxu0 %v824
      %v888 = vpop.f32.mrf.mxu0
      %v889 = vadd.f32 0.0, %v888
      %890 = vdwg.mxu0
      %v891 = vadd.f32 %v673, %v844
      %v892 = vadd.f32 %v674, %v847
      %v893 = vadd.f32 %v675, %v850
      %v894 = vadd.f32 %v676, %v853
      %v895 = vadd.f32 %v677, %v856
      %v896 = vadd.f32 %v678, %v859
      %v897 = vadd.f32 %v679, %v862
      %v898 = vadd.f32 %v680, %v865
      %v899 = vadd.f32 %v681, %v868
      %v900 = vadd.f32 %v682, %v871
      %v901 = vadd.f32 %v683, %v874
      %v902 = vadd.f32 %v684, %v877
      %v903 = vadd.f32 %v685, %v880
      %v904 = vadd.f32 %v686, %v883
      %v905 = vadd.f32 %v687, %v886
      %v906 = vadd.f32 %v688, %v889
      %s907 = scalar_lea.vmem %s1, 256
      %v908 = vld [vmem:[%s907] sm:$0xff]
      %v909 = vld [vmem:[%s907 + $0x8] sm:$0xff]
      %v910 = vld [vmem:[%s907 + $0x10] sm:$0xff]
      %v911 = vld [vmem:[%s907 + $0x18] sm:$0xff]
      %v912 = vld [vmem:[%s907 + $0x20] sm:$0xff]
      %v913 = vld [vmem:[%s907 + $0x28] sm:$0xff]
      %v914 = vld [vmem:[%s907 + $0x30] sm:$0xff]
      %v915 = vld [vmem:[%s907 + $0x38] sm:$0xff]
      %v916 = vld [vmem:[%s907 + $0x40] sm:$0xff]
      %v917 = vld [vmem:[%s907 + $0x48] sm:$0xff]
      %v918 = vld [vmem:[%s907 + $0x50] sm:$0xff]
      %v919 = vld [vmem:[%s907 + $0x58] sm:$0xff]
      %v920 = vld [vmem:[%s907 + $0x60] sm:$0xff]
      %v921 = vld [vmem:[%s907 + $0x68] sm:$0xff]
      %v922 = vld [vmem:[%s907 + $0x70] sm:$0xff]
      %v923 = vld [vmem:[%s907 + $0x78] sm:$0xff]
      %924 = vmatpush.msra.mxu0 %v375
      %925 = vmatpush.msra.mxu0 %v374
      %926 = vmatpush.msra.mxu0 %v373
      %927 = vmatpush.msra.mxu0 %v372
      %928 = vmatpush.msra.mxu0 %v371
      %929 = vmatpush.msra.mxu0 %v370
      %930 = vmatpush.msra.mxu0 %v369
      %931 = vmatpush.msra.mxu0 %v368
      %932 = vmatpush.msra.mxu0 %v367
      %933 = vmatpush.msra.mxu0 %v366
      %934 = vmatpush.msra.mxu0 %v365
      %935 = vmatpush.msra.mxu0 %v364
      %936 = vmatpush.msra.mxu0 %v363
      %937 = vmatpush.msra.mxu0 %v362
      %938 = vmatpush.msra.mxu0 %v361
      %939 = vmatpush.msra.mxu0 %v360
      %940 = vmatmul.f32.gmra.mxu0 %v908
      %v941 = vpop.f32.mrf.mxu0
      %v942 = vadd.f32 0.0, %v941
      %943 = vmatmul.f32.gmra.mxu0 %v909
      %v944 = vpop.f32.mrf.mxu0
      %v945 = vadd.f32 0.0, %v944
      %946 = vmatmul.f32.gmra.mxu0 %v910
      %v947 = vpop.f32.mrf.mxu0
      %v948 = vadd.f32 0.0, %v947
      %949 = vmatmul.f32.gmra.mxu0 %v911
      %v950 = vpop.f32.mrf.mxu0
      %v951 = vadd.f32 0.0, %v950
      %952 = vmatmul.f32.gmra.mxu0 %v912
      %v953 = vpop.f32.mrf.mxu0
      %v954 = vadd.f32 0.0, %v953
      %955 = vmatmul.f32.gmra.mxu0 %v913
      %v956 = vpop.f32.mrf.mxu0
      %v957 = vadd.f32 0.0, %v956
      %958 = vmatmul.f32.gmra.mxu0 %v914
      %v959 = vpop.f32.mrf.mxu0
      %v960 = vadd.f32 0.0, %v959
      %961 = vmatmul.f32.gmra.mxu0 %v915
      %v962 = vpop.f32.mrf.mxu0
      %v963 = vadd.f32 0.0, %v962
      %964 = vmatmul.f32.gmra.mxu0 %v916
      %v965 = vpop.f32.mrf.mxu0
      %v966 = vadd.f32 0.0, %v965
      %967 = vmatmul.f32.gmra.mxu0 %v917
      %v968 = vpop.f32.mrf.mxu0
      %v969 = vadd.f32 0.0, %v968
      %970 = vmatmul.f32.gmra.mxu0 %v918
      %v971 = vpop.f32.mrf.mxu0
      %v972 = vadd.f32 0.0, %v971
      %973 = vmatmul.f32.gmra.mxu0 %v919
      %v974 = vpop.f32.mrf.mxu0
      %v975 = vadd.f32 0.0, %v974
      %976 = vmatmul.f32.gmra.mxu0 %v920
      %v977 = vpop.f32.mrf.mxu0
      %v978 = vadd.f32 0.0, %v977
      %979 = vmatmul.f32.gmra.mxu0 %v921
      %v980 = vpop.f32.mrf.mxu0
      %v981 = vadd.f32 0.0, %v980
      %982 = vmatmul.f32.gmra.mxu0 %v922
      %v983 = vpop.f32.mrf.mxu0
      %v984 = vadd.f32 0.0, %v983
      %985 = vmatmul.f32.gmra.mxu0 %v923
      %v986 = vpop.f32.mrf.mxu0
      %v987 = vadd.f32 0.0, %v986
      %988 = vdwg.mxu0
      %s989 = scalar_lea.vmem %s3, 96
      %v990 = vld [vmem:[%s989] sm:$0xff]
      %v991 = vld [vmem:[%s989 + $0x8] sm:$0xff]
      %v992 = vld [vmem:[%s989 + $0x10] sm:$0xff]
      %v993 = vld [vmem:[%s989 + $0x18] sm:$0xff]
      %v994 = vld [vmem:[%s989 + $0x20] sm:$0xff]
      %v995 = vld [vmem:[%s989 + $0x28] sm:$0xff]
      %v997 = vsel %vm479, %v942, 0
      %v1000 = vsel %vm479, %v945, 0
      %v1003 = vsel %vm479, %v948, 0
      %v1006 = vsel %vm479, %v951, 0
      %v1009 = vsel %vm479, %v954, 0
      %v1012 = vsel %vm479, %v957, 0
      %v1015 = vsel %vm479, %v960, 0
      %v1018 = vsel %vm479, %v963, 0
      %v1021 = vsel %vm479, %v966, 0
      %v1024 = vsel %vm479, %v969, 0
      %v1027 = vsel %vm479, %v972, 0
      %v1030 = vsel %vm479, %v975, 0
      %v1033 = vsel %vm479, %v978, 0
      %v1036 = vsel %vm479, %v981, 0
      %v1039 = vsel %vm479, %v984, 0
      %v1042 = vsel %vm479, %v987, 0
      %1044 = vmatpush.msra.mxu0 0.0
      %1045 = vmatpush.msra.mxu0 0.0
      %1046 = vmatpush.msra.mxu0 0.0
      %1047 = vmatpush.msra.mxu0 0.0
      %1048 = vmatpush.msra.mxu0 0.0
      %1049 = vmatpush.msra.mxu0 0.0
      %1050 = vmatpush.msra.mxu0 0.0
      %1051 = vmatpush.msra.mxu0 0.0
      %1052 = vmatpush.msra.mxu0 0.0
      %1053 = vmatpush.msra.mxu0 0.0
      %1054 = vmatpush.msra.mxu0 %v995
      %1055 = vmatpush.msra.mxu0 %v994
      %1056 = vmatpush.msra.mxu0 %v993
      %1057 = vmatpush.msra.mxu0 %v992
      %1058 = vmatpush.msra.mxu0 %v991
      %1059 = vmatpush.msra.mxu0 %v990
      %1060 = vmatmul.f32.gmra.mxu0 %v997
      %v1061 = vpop.f32.mrf.mxu0
      %v1062 = vadd.f32 0.0, %v1061
      %1063 = vmatmul.f32.gmra.mxu0 %v1000
      %v1064 = vpop.f32.mrf.mxu0
      %v1065 = vadd.f32 0.0, %v1064
      %1066 = vmatmul.f32.gmra.mxu0 %v1003
      %v1067 = vpop.f32.mrf.mxu0
      %v1068 = vadd.f32 0.0, %v1067
      %1069 = vmatmul.f32.gmra.mxu0 %v1006
      %v1070 = vpop.f32.mrf.mxu0
      %v1071 = vadd.f32 0.0, %v1070
      %1072 = vmatmul.f32.gmra.mxu0 %v1009
      %v1073 = vpop.f32.mrf.mxu0
      %v1074 = vadd.f32 0.0, %v1073
      %1075 = vmatmul.f32.gmra.mxu0 %v1012
      %v1076 = vpop.f32.mrf.mxu0
      %v1077 = vadd.f32 0.0, %v1076
      %1078 = vmatmul.f32.gmra.mxu0 %v1015
      %v1079 = vpop.f32.mrf.mxu0
      %v1080 = vadd.f32 0.0, %v1079
      %1081 = vmatmul.f32.gmra.mxu0 %v1018
      %v1082 = vpop.f32.mrf.mxu0
      %v1083 = vadd.f32 0.0, %v1082
      %1084 = vmatmul.f32.gmra.mxu0 %v1021
      %v1085 = vpop.f32.mrf.mxu0
      %v1086 = vadd.f32 0.0, %v1085
      %1087 = vmatmul.f32.gmra.mxu0 %v1024
      %v1088 = vpop.f32.mrf.mxu0
      %v1089 = vadd.f32 0.0, %v1088
      %1090 = vmatmul.f32.gmra.mxu0 %v1027
      %v1091 = vpop.f32.mrf.mxu0
      %v1092 = vadd.f32 0.0, %v1091
      %1093 = vmatmul.f32.gmra.mxu0 %v1030
      %v1094 = vpop.f32.mrf.mxu0
      %v1095 = vadd.f32 0.0, %v1094
      %1096 = vmatmul.f32.gmra.mxu0 %v1033
      %v1097 = vpop.f32.mrf.mxu0
      %v1098 = vadd.f32 0.0, %v1097
      %1099 = vmatmul.f32.gmra.mxu0 %v1036
      %v1100 = vpop.f32.mrf.mxu0
      %v1101 = vadd.f32 0.0, %v1100
      %1102 = vmatmul.f32.gmra.mxu0 %v1039
      %v1103 = vpop.f32.mrf.mxu0
      %v1104 = vadd.f32 0.0, %v1103
      %1105 = vmatmul.f32.gmra.mxu0 %v1042
      %v1106 = vpop.f32.mrf.mxu0
      %v1107 = vadd.f32 0.0, %v1106
      %1108 = vdwg.mxu0
      %v1109 = vadd.f32 %v891, %v1062
      %v1110 = vadd.f32 %v892, %v1065
      %v1111 = vadd.f32 %v893, %v1068
      %v1112 = vadd.f32 %v894, %v1071
      %v1113 = vadd.f32 %v895, %v1074
      %v1114 = vadd.f32 %v896, %v1077
      %v1115 = vadd.f32 %v897, %v1080
      %v1116 = vadd.f32 %v898, %v1083
      %v1117 = vadd.f32 %v899, %v1086
      %v1118 = vadd.f32 %v900, %v1089
      %v1119 = vadd.f32 %v901, %v1092
      %v1120 = vadd.f32 %v902, %v1095
      %v1121 = vadd.f32 %v903, %v1098
      %v1122 = vadd.f32 %v904, %v1101
      %v1123 = vadd.f32 %v905, %v1104
      %v1124 = vadd.f32 %v906, %v1107
      %vm1125 = vcmp.gt.f32.partialorder %v1109, 0.0
      %vm1126 = vcmp.gt.f32.partialorder %v1110, 0.0
      %vm1127 = vcmp.gt.f32.partialorder %v1111, 0.0
      %vm1128 = vcmp.gt.f32.partialorder %v1112, 0.0
      %vm1129 = vcmp.gt.f32.partialorder %v1113, 0.0
      %vm1130 = vcmp.gt.f32.partialorder %v1114, 0.0
      %vm1131 = vcmp.gt.f32.partialorder %v1115, 0.0
      %vm1132 = vcmp.gt.f32.partialorder %v1116, 0.0
      %vm1133 = vcmp.gt.f32.partialorder %v1117, 0.0
      %vm1134 = vcmp.gt.f32.partialorder %v1118, 0.0
      %vm1135 = vcmp.gt.f32.partialorder %v1119, 0.0
      %vm1136 = vcmp.gt.f32.partialorder %v1120, 0.0
      %vm1137 = vcmp.gt.f32.partialorder %v1121, 0.0
      %vm1138 = vcmp.gt.f32.partialorder %v1122, 0.0
      %vm1139 = vcmp.gt.f32.partialorder %v1123, 0.0
      %vm1140 = vcmp.gt.f32.partialorder %v1124, 0.0
      %v1141 = vmul.f32 %v1109, 1.442695
      %v1142 = vpow.pop %v1141
      %v1143 = vmul.f32 %v1110, 1.442695
      %v1144 = vpow.pop %v1143
      %v1145 = vmul.f32 %v1111, 1.442695
      %v1146 = vpow.pop %v1145
      %v1147 = vmul.f32 %v1112, 1.442695
      %v1148 = vpow.pop %v1147
      %v1149 = vmul.f32 %v1113, 1.442695
      %v1150 = vpow.pop %v1149
      %v1151 = vmul.f32 %v1114, 1.442695
      %v1152 = vpow.pop %v1151
      %v1153 = vmul.f32 %v1115, 1.442695
      %v1154 = vpow.pop %v1153
      %v1155 = vmul.f32 %v1116, 1.442695
      %v1156 = vpow.pop %v1155
      %v1157 = vmul.f32 %v1117, 1.442695
      %v1158 = vpow.pop %v1157
      %v1159 = vmul.f32 %v1118, 1.442695
      %v1160 = vpow.pop %v1159
      %v1161 = vmul.f32 %v1119, 1.442695
      %v1162 = vpow.pop %v1161
      %v1163 = vmul.f32 %v1120, 1.442695
      %v1164 = vpow.pop %v1163
      %v1165 = vmul.f32 %v1121, 1.442695
      %v1166 = vpow.pop %v1165
      %v1167 = vmul.f32 %v1122, 1.442695
      %v1168 = vpow.pop %v1167
      %v1169 = vmul.f32 %v1123, 1.442695
      %v1170 = vpow.pop %v1169
      %v1171 = vmul.f32 %v1124, 1.442695
      %v1172 = vpow.pop %v1171
      %v1173 = vsub.f32 %v1142, 1.0
      %v1174 = vsub.f32 %v1144, 1.0
      %v1175 = vsub.f32 %v1146, 1.0
      %v1176 = vsub.f32 %v1148, 1.0
      %v1177 = vsub.f32 %v1150, 1.0
      %v1178 = vsub.f32 %v1152, 1.0
      %v1179 = vsub.f32 %v1154, 1.0
      %v1180 = vsub.f32 %v1156, 1.0
      %v1181 = vsub.f32 %v1158, 1.0
      %v1182 = vsub.f32 %v1160, 1.0
      %v1183 = vsub.f32 %v1162, 1.0
      %v1184 = vsub.f32 %v1164, 1.0
      %v1185 = vsub.f32 %v1166, 1.0
      %v1186 = vsub.f32 %v1168, 1.0
      %v1187 = vsub.f32 %v1170, 1.0
      %v1188 = vsub.f32 %v1172, 1.0
      %v1189 = vsel %vm1125, %v1109, %v1173
      %v1190 = vsel %vm1126, %v1110, %v1174
      %v1191 = vsel %vm1127, %v1111, %v1175
      %v1192 = vsel %vm1128, %v1112, %v1176
      %v1193 = vsel %vm1129, %v1113, %v1177
      %v1194 = vsel %vm1130, %v1114, %v1178
      %v1195 = vsel %vm1131, %v1115, %v1179
      %v1196 = vsel %vm1132, %v1116, %v1180
      %v1197 = vsel %vm1133, %v1117, %v1181
      %v1198 = vsel %vm1134, %v1118, %v1182
      %v1199 = vsel %vm1135, %v1119, %v1183
      %v1200 = vsel %vm1136, %v1120, %v1184
      %v1201 = vsel %vm1137, %v1121, %v1185
      %v1202 = vsel %vm1138, %v1122, %v1186
      %v1203 = vsel %vm1139, %v1123, %v1187
      %v1204 = vsel %vm1140, %v1124, %v1188
      %v1205 = vld [vmem:[%s5] sm:$0xff]
      %v1206 = vld [vmem:[%s5 + $0x8] sm:$0xff]
      %v1207 = vld [vmem:[%s5 + $0x10] sm:$0xff]
      %v1208 = vld [vmem:[%s5 + $0x18] sm:$0xff]
      %v1209 = vld [vmem:[%s5 + $0x20] sm:$0xff]
      %v1210 = vld [vmem:[%s5 + $0x28] sm:$0xff]
      %v1211 = vld [vmem:[%s5 + $0x30] sm:$0xff]
      %v1212 = vld [vmem:[%s5 + $0x38] sm:$0xff]
      %v1213 = vld [vmem:[%s5 + $0x40] sm:$0xff]
      %v1214 = vld [vmem:[%s5 + $0x48] sm:$0xff]
      %v1215 = vld [vmem:[%s5 + $0x50] sm:$0xff]
      %v1216 = vld [vmem:[%s5 + $0x58] sm:$0xff]
      %v1217 = vld [vmem:[%s5 + $0x60] sm:$0xff]
      %v1218 = vld [vmem:[%s5 + $0x68] sm:$0xff]
      %v1219 = vld [vmem:[%s5 + $0x70] sm:$0xff]
      %v1220 = vld [vmem:[%s5 + $0x78] sm:$0xff]
      %v1221 = vld [vmem:[%s4] sm:$0xff]
      %v1222 = vld [vmem:[%s4 + $0x8] sm:$0xff]
      %v1223 = vld [vmem:[%s4 + $0x10] sm:$0xff]
      %v1224 = vld [vmem:[%s4 + $0x18] sm:$0xff]
      %v1225 = vld [vmem:[%s4 + $0x20] sm:$0xff]
      %v1226 = vld [vmem:[%s4 + $0x28] sm:$0xff]
      %v1227 = vld [vmem:[%s4 + $0x30] sm:$0xff]
      %v1228 = vld [vmem:[%s4 + $0x38] sm:$0xff]
      %v1229 = vld [vmem:[%s4 + $0x40] sm:$0xff]
      %v1230 = vld [vmem:[%s4 + $0x48] sm:$0xff]
      %v1231 = vld [vmem:[%s4 + $0x50] sm:$0xff]
      %v1232 = vld [vmem:[%s4 + $0x58] sm:$0xff]
      %v1233 = vld [vmem:[%s4 + $0x60] sm:$0xff]
      %v1234 = vld [vmem:[%s4 + $0x68] sm:$0xff]
      %v1235 = vld [vmem:[%s4 + $0x70] sm:$0xff]
      %v1236 = vld [vmem:[%s4 + $0x78] sm:$0xff]
      %1237 = vmatpush.msra.mxu0 %v1204
      %1238 = vmatpush.msra.mxu0 %v1203
      %1239 = vmatpush.msra.mxu0 %v1202
      %1240 = vmatpush.msra.mxu0 %v1201
      %1241 = vmatpush.msra.mxu0 %v1200
      %1242 = vmatpush.msra.mxu0 %v1199
      %1243 = vmatpush.msra.mxu0 %v1198
      %1244 = vmatpush.msra.mxu0 %v1197
      %1245 = vmatpush.msra.mxu0 %v1196
      %1246 = vmatpush.msra.mxu0 %v1195
      %1247 = vmatpush.msra.mxu0 %v1194
      %1248 = vmatpush.msra.mxu0 %v1193
      %1249 = vmatpush.msra.mxu0 %v1192
      %1250 = vmatpush.msra.mxu0 %v1191
      %1251 = vmatpush.msra.mxu0 %v1190
      %1252 = vmatpush.msra.mxu0 %v1189
      %1253 = vmatmul.f32.gmra.mxu0 %v1221
      %v1254 = vpop.f32.mrf.mxu0
      %v1255 = vadd.f32 0.0, %v1254
      %1256 = vmatmul.f32.gmra.mxu0 %v1222
      %v1257 = vpop.f32.mrf.mxu0
      %v1258 = vadd.f32 0.0, %v1257
      %1259 = vmatmul.f32.gmra.mxu0 %v1223
      %v1260 = vpop.f32.mrf.mxu0
      %v1261 = vadd.f32 0.0, %v1260
      %1262 = vmatmul.f32.gmra.mxu0 %v1224
      %v1263 = vpop.f32.mrf.mxu0
      %v1264 = vadd.f32 0.0, %v1263
      %1265 = vmatmul.f32.gmra.mxu0 %v1225
      %v1266 = vpop.f32.mrf.mxu0
      %v1267 = vadd.f32 0.0, %v1266
      %1268 = vmatmul.f32.gmra.mxu0 %v1226
      %v1269 = vpop.f32.mrf.mxu0
      %v1270 = vadd.f32 0.0, %v1269
      %1271 = vmatmul.f32.gmra.mxu0 %v1227
      %v1272 = vpop.f32.mrf.mxu0
      %v1273 = vadd.f32 0.0, %v1272
      %1274 = vmatmul.f32.gmra.mxu0 %v1228
      %v1275 = vpop.f32.mrf.mxu0
      %v1276 = vadd.f32 0.0, %v1275
      %1277 = vmatmul.f32.gmra.mxu0 %v1229
      %v1278 = vpop.f32.mrf.mxu0
      %v1279 = vadd.f32 0.0, %v1278
      %1280 = vmatmul.f32.gmra.mxu0 %v1230
      %v1281 = vpop.f32.mrf.mxu0
      %v1282 = vadd.f32 0.0, %v1281
      %1283 = vmatmul.f32.gmra.mxu0 %v1231
      %v1284 = vpop.f32.mrf.mxu0
      %v1285 = vadd.f32 0.0, %v1284
      %1286 = vmatmul.f32.gmra.mxu0 %v1232
      %v1287 = vpop.f32.mrf.mxu0
      %v1288 = vadd.f32 0.0, %v1287
      %1289 = vmatmul.f32.gmra.mxu0 %v1233
      %v1290 = vpop.f32.mrf.mxu0
      %v1291 = vadd.f32 0.0, %v1290
      %1292 = vmatmul.f32.gmra.mxu0 %v1234
      %v1293 = vpop.f32.mrf.mxu0
      %v1294 = vadd.f32 0.0, %v1293
      %1295 = vmatmul.f32.gmra.mxu0 %v1235
      %v1296 = vpop.f32.mrf.mxu0
      %v1297 = vadd.f32 0.0, %v1296
      %1298 = vmatmul.f32.gmra.mxu0 %v1236
      %v1299 = vpop.f32.mrf.mxu0
      %v1300 = vadd.f32 0.0, %v1299
      %1301 = vdwg.mxu0
      %v1302 = vld [vmem:[%s6] sm:$0xff]
      %v1303 = vld [vmem:[%s6 + $0x8] sm:$0xff]
      %v1304 = vld [vmem:[%s6 + $0x10] sm:$0xff]
      %v1305 = vld [vmem:[%s6 + $0x18] sm:$0xff]
      %v1306 = vld [vmem:[%s6 + $0x20] sm:$0xff]
      %v1307 = vld [vmem:[%s6 + $0x28] sm:$0xff]
      %v1308 = vld [vmem:[%s6 + $0x30] sm:$0xff]
      %vm1309 = vcmask 457728
      %v1311 = vsel %vm1309, %v1255, 0
      %v1314 = vsel %vm1309, %v1258, 0
      %v1317 = vsel %vm1309, %v1261, 0
      %v1320 = vsel %vm1309, %v1264, 0
      %v1323 = vsel %vm1309, %v1267, 0
      %v1326 = vsel %vm1309, %v1270, 0
      %v1329 = vsel %vm1309, %v1273, 0
      %v1332 = vsel %vm1309, %v1276, 0
      %v1335 = vsel %vm1309, %v1279, 0
      %v1338 = vsel %vm1309, %v1282, 0
      %v1341 = vsel %vm1309, %v1285, 0
      %v1344 = vsel %vm1309, %v1288, 0
      %v1347 = vsel %vm1309, %v1291, 0
      %v1350 = vsel %vm1309, %v1294, 0
      %v1353 = vsel %vm1309, %v1297, 0
      %v1356 = vsel %vm1309, %v1300, 0
      %1358 = vmatpush.msra.mxu0 0.0
      %1359 = vmatpush.msra.mxu0 0.0
      %1360 = vmatpush.msra.mxu0 0.0
      %1361 = vmatpush.msra.mxu0 0.0
      %1362 = vmatpush.msra.mxu0 0.0
      %1363 = vmatpush.msra.mxu0 0.0
      %1364 = vmatpush.msra.mxu0 0.0
      %1365 = vmatpush.msra.mxu0 0.0
      %1366 = vmatpush.msra.mxu0 0.0
      %1367 = vmatpush.msra.mxu0 %v1308
      %1368 = vmatpush.msra.mxu0 %v1307
      %1369 = vmatpush.msra.mxu0 %v1306
      %1370 = vmatpush.msra.mxu0 %v1305
      %1371 = vmatpush.msra.mxu0 %v1304
      %1372 = vmatpush.msra.mxu0 %v1303
      %1373 = vmatpush.msra.mxu0 %v1302
      %1374 = vmatmul.f32.gmra.mxu0 %v1311
      %v1375 = vpop.f32.mrf.mxu0
      %v1376 = vadd.f32 0.0, %v1375
      %1377 = vmatmul.f32.gmra.mxu0 %v1314
      %v1378 = vpop.f32.mrf.mxu0
      %v1379 = vadd.f32 0.0, %v1378
      %1380 = vmatmul.f32.gmra.mxu0 %v1317
      %v1381 = vpop.f32.mrf.mxu0
      %v1382 = vadd.f32 0.0, %v1381
      %1383 = vmatmul.f32.gmra.mxu0 %v1320
      %v1384 = vpop.f32.mrf.mxu0
      %v1385 = vadd.f32 0.0, %v1384
      %1386 = vmatmul.f32.gmra.mxu0 %v1323
      %v1387 = vpop.f32.mrf.mxu0
      %v1388 = vadd.f32 0.0, %v1387
      %1389 = vmatmul.f32.gmra.mxu0 %v1326
      %v1390 = vpop.f32.mrf.mxu0
      %v1391 = vadd.f32 0.0, %v1390
      %1392 = vmatmul.f32.gmra.mxu0 %v1329
      %v1393 = vpop.f32.mrf.mxu0
      %v1394 = vadd.f32 0.0, %v1393
      %1395 = vmatmul.f32.gmra.mxu0 %v1332
      %v1396 = vpop.f32.mrf.mxu0
      %v1397 = vadd.f32 0.0, %v1396
      %1398 = vmatmul.f32.gmra.mxu0 %v1335
      %v1399 = vpop.f32.mrf.mxu0
      %v1400 = vadd.f32 0.0, %v1399
      %1401 = vmatmul.f32.gmra.mxu0 %v1338
      %v1402 = vpop.f32.mrf.mxu0
      %v1403 = vadd.f32 0.0, %v1402
      %1404 = vmatmul.f32.gmra.mxu0 %v1341
      %v1405 = vpop.f32.mrf.mxu0
      %v1406 = vadd.f32 0.0, %v1405
      %1407 = vmatmul.f32.gmra.mxu0 %v1344
      %v1408 = vpop.f32.mrf.mxu0
      %v1409 = vadd.f32 0.0, %v1408
      %1410 = vmatmul.f32.gmra.mxu0 %v1347
      %v1411 = vpop.f32.mrf.mxu0
      %v1412 = vadd.f32 0.0, %v1411
      %1413 = vmatmul.f32.gmra.mxu0 %v1350
      %v1414 = vpop.f32.mrf.mxu0
      %v1415 = vadd.f32 0.0, %v1414
      %1416 = vmatmul.f32.gmra.mxu0 %v1353
      %v1417 = vpop.f32.mrf.mxu0
      %v1418 = vadd.f32 0.0, %v1417
      %1419 = vmatmul.f32.gmra.mxu0 %v1356
      %v1420 = vpop.f32.mrf.mxu0
      %v1421 = vadd.f32 0.0, %v1420
      %1422 = vdwg.mxu0
      %1424 = vset.pattern.permute.xlu0 0
      %1425 = vperm.xlu0 %1424, %v1205
      %v1426 = vpop.permute.xlu0 %1425
      %1429 = vset.pattern.permute.xlu0 0
      %1430 = vperm.xlu0 %1429, %v1206
      %v1431 = vpop.permute.xlu0 %1430
      %1434 = vset.pattern.permute.xlu0 0
      %1435 = vperm.xlu0 %1434, %v1207
      %v1436 = vpop.permute.xlu0 %1435
      %1439 = vset.pattern.permute.xlu0 0
      %1440 = vperm.xlu0 %1439, %v1208
      %v1441 = vpop.permute.xlu0 %1440
      %1444 = vset.pattern.permute.xlu0 0
      %1445 = vperm.xlu0 %1444, %v1209
      %v1446 = vpop.permute.xlu0 %1445
      %1449 = vset.pattern.permute.xlu0 0
      %1450 = vperm.xlu0 %1449, %v1210
      %v1451 = vpop.permute.xlu0 %1450
      %1454 = vset.pattern.permute.xlu0 0
      %1455 = vperm.xlu0 %1454, %v1211
      %v1456 = vpop.permute.xlu0 %1455
      %1459 = vset.pattern.permute.xlu0 0
      %1460 = vperm.xlu0 %1459, %v1212
      %v1461 = vpop.permute.xlu0 %1460
      %1464 = vset.pattern.permute.xlu0 0
      %1465 = vperm.xlu0 %1464, %v1213
      %v1466 = vpop.permute.xlu0 %1465
      %1469 = vset.pattern.permute.xlu0 0
      %1470 = vperm.xlu0 %1469, %v1214
      %v1471 = vpop.permute.xlu0 %1470
      %1474 = vset.pattern.permute.xlu0 0
      %1475 = vperm.xlu0 %1474, %v1215
      %v1476 = vpop.permute.xlu0 %1475
      %1479 = vset.pattern.permute.xlu0 0
      %1480 = vperm.xlu0 %1479, %v1216
      %v1481 = vpop.permute.xlu0 %1480
      %1484 = vset.pattern.permute.xlu0 0
      %1485 = vperm.xlu0 %1484, %v1217
      %v1486 = vpop.permute.xlu0 %1485
      %1489 = vset.pattern.permute.xlu0 0
      %1490 = vperm.xlu0 %1489, %v1218
      %v1491 = vpop.permute.xlu0 %1490
      %1494 = vset.pattern.permute.xlu0 0
      %1495 = vperm.xlu0 %1494, %v1219
      %v1496 = vpop.permute.xlu0 %1495
      %1499 = vset.pattern.permute.xlu0 0
      %1500 = vperm.xlu0 %1499, %v1220
      %v1501 = vpop.permute.xlu0 %1500
      %v1503 = vadd.f32 %v1426, %v1376
      %v1504 = vadd.f32 %v1431, %v1379
      %v1505 = vadd.f32 %v1436, %v1382
      %v1506 = vadd.f32 %v1441, %v1385
      %v1507 = vadd.f32 %v1446, %v1388
      %v1508 = vadd.f32 %v1451, %v1391
      %v1509 = vadd.f32 %v1456, %v1394
      %v1510 = vadd.f32 %v1461, %v1397
      %v1511 = vadd.f32 %v1466, %v1400
      %v1512 = vadd.f32 %v1471, %v1403
      %v1513 = vadd.f32 %v1476, %v1406
      %v1514 = vadd.f32 %v1481, %v1409
      %v1515 = vadd.f32 %v1486, %v1412
      %v1516 = vadd.f32 %v1491, %v1415
      %v1517 = vadd.f32 %v1496, %v1418
      %v1518 = vadd.f32 %v1501, %v1421
      %s1519 = scalar_lea.vmem %s4, 128
      %v1520 = vld [vmem:[%s1519] sm:$0xff]
      %v1521 = vld [vmem:[%s1519 + $0x8] sm:$0xff]
      %v1522 = vld [vmem:[%s1519 + $0x10] sm:$0xff]
      %v1523 = vld [vmem:[%s1519 + $0x18] sm:$0xff]
      %v1524 = vld [vmem:[%s1519 + $0x20] sm:$0xff]
      %v1525 = vld [vmem:[%s1519 + $0x28] sm:$0xff]
      %v1526 = vld [vmem:[%s1519 + $0x30] sm:$0xff]
      %v1527 = vld [vmem:[%s1519 + $0x38] sm:$0xff]
      %v1528 = vld [vmem:[%s1519 + $0x40] sm:$0xff]
      %v1529 = vld [vmem:[%s1519 + $0x48] sm:$0xff]
      %v1530 = vld [vmem:[%s1519 + $0x50] sm:$0xff]
      %v1531 = vld [vmem:[%s1519 + $0x58] sm:$0xff]
      %v1532 = vld [vmem:[%s1519 + $0x60] sm:$0xff]
      %v1533 = vld [vmem:[%s1519 + $0x68] sm:$0xff]
      %v1534 = vld [vmem:[%s1519 + $0x70] sm:$0xff]
      %v1535 = vld [vmem:[%s1519 + $0x78] sm:$0xff]
      %1536 = vmatpush.msra.mxu0 %v1204
      %1537 = vmatpush.msra.mxu0 %v1203
      %1538 = vmatpush.msra.mxu0 %v1202
      %1539 = vmatpush.msra.mxu0 %v1201
      %1540 = vmatpush.msra.mxu0 %v1200
      %1541 = vmatpush.msra.mxu0 %v1199
      %1542 = vmatpush.msra.mxu0 %v1198
      %1543 = vmatpush.msra.mxu0 %v1197
      %1544 = vmatpush.msra.mxu0 %v1196
      %1545 = vmatpush.msra.mxu0 %v1195
      %1546 = vmatpush.msra.mxu0 %v1194
      %1547 = vmatpush.msra.mxu0 %v1193
      %1548 = vmatpush.msra.mxu0 %v1192
      %1549 = vmatpush.msra.mxu0 %v1191
      %1550 = vmatpush.msra.mxu0 %v1190
      %1551 = vmatpush.msra.mxu0 %v1189
      %1552 = vmatmul.f32.gmra.mxu0 %v1520
      %v1553 = vpop.f32.mrf.mxu0
      %v1554 = vadd.f32 0.0, %v1553
      %1555 = vmatmul.f32.gmra.mxu0 %v1521
      %v1556 = vpop.f32.mrf.mxu0
      %v1557 = vadd.f32 0.0, %v1556
      %1558 = vmatmul.f32.gmra.mxu0 %v1522
      %v1559 = vpop.f32.mrf.mxu0
      %v1560 = vadd.f32 0.0, %v1559
      %1561 = vmatmul.f32.gmra.mxu0 %v1523
      %v1562 = vpop.f32.mrf.mxu0
      %v1563 = vadd.f32 0.0, %v1562
      %1564 = vmatmul.f32.gmra.mxu0 %v1524
      %v1565 = vpop.f32.mrf.mxu0
      %v1566 = vadd.f32 0.0, %v1565
      %1567 = vmatmul.f32.gmra.mxu0 %v1525
      %v1568 = vpop.f32.mrf.mxu0
      %v1569 = vadd.f32 0.0, %v1568
      %1570 = vmatmul.f32.gmra.mxu0 %v1526
      %v1571 = vpop.f32.mrf.mxu0
      %v1572 = vadd.f32 0.0, %v1571
      %1573 = vmatmul.f32.gmra.mxu0 %v1527
      %v1574 = vpop.f32.mrf.mxu0
      %v1575 = vadd.f32 0.0, %v1574
      %1576 = vmatmul.f32.gmra.mxu0 %v1528
      %v1577 = vpop.f32.mrf.mxu0
      %v1578 = vadd.f32 0.0, %v1577
      %1579 = vmatmul.f32.gmra.mxu0 %v1529
      %v1580 = vpop.f32.mrf.mxu0
      %v1581 = vadd.f32 0.0, %v1580
      %1582 = vmatmul.f32.gmra.mxu0 %v1530
      %v1583 = vpop.f32.mrf.mxu0
      %v1584 = vadd.f32 0.0, %v1583
      %1585 = vmatmul.f32.gmra.mxu0 %v1531
      %v1586 = vpop.f32.mrf.mxu0
      %v1587 = vadd.f32 0.0, %v1586
      %1588 = vmatmul.f32.gmra.mxu0 %v1532
      %v1589 = vpop.f32.mrf.mxu0
      %v1590 = vadd.f32 0.0, %v1589
      %1591 = vmatmul.f32.gmra.mxu0 %v1533
      %v1592 = vpop.f32.mrf.mxu0
      %v1593 = vadd.f32 0.0, %v1592
      %1594 = vmatmul.f32.gmra.mxu0 %v1534
      %v1595 = vpop.f32.mrf.mxu0
      %v1596 = vadd.f32 0.0, %v1595
      %1597 = vmatmul.f32.gmra.mxu0 %v1535
      %v1598 = vpop.f32.mrf.mxu0
      %v1599 = vadd.f32 0.0, %v1598
      %1600 = vdwg.mxu0
      %s1601 = scalar_lea.vmem %s6, 56
      %v1602 = vld [vmem:[%s1601] sm:$0xff]
      %v1603 = vld [vmem:[%s1601 + $0x8] sm:$0xff]
      %v1604 = vld [vmem:[%s1601 + $0x10] sm:$0xff]
      %v1605 = vld [vmem:[%s1601 + $0x18] sm:$0xff]
      %v1606 = vld [vmem:[%s1601 + $0x20] sm:$0xff]
      %v1607 = vld [vmem:[%s1601 + $0x28] sm:$0xff]
      %v1608 = vld [vmem:[%s1601 + $0x30] sm:$0xff]
      %v1610 = vsel %vm1309, %v1554, 0
      %v1613 = vsel %vm1309, %v1557, 0
      %v1616 = vsel %vm1309, %v1560, 0
      %v1619 = vsel %vm1309, %v1563, 0
      %v1622 = vsel %vm1309, %v1566, 0
      %v1625 = vsel %vm1309, %v1569, 0
      %v1628 = vsel %vm1309, %v1572, 0
      %v1631 = vsel %vm1309, %v1575, 0
      %v1634 = vsel %vm1309, %v1578, 0
      %v1637 = vsel %vm1309, %v1581, 0
      %v1640 = vsel %vm1309, %v1584, 0
      %v1643 = vsel %vm1309, %v1587, 0
      %v1646 = vsel %vm1309, %v1590, 0
      %v1649 = vsel %vm1309, %v1593, 0
      %v1652 = vsel %vm1309, %v1596, 0
      %v1655 = vsel %vm1309, %v1599, 0
      %1657 = vmatpush.msra.mxu0 0.0
      %1658 = vmatpush.msra.mxu0 0.0
      %1659 = vmatpush.msra.mxu0 0.0
      %1660 = vmatpush.msra.mxu0 0.0
      %1661 = vmatpush.msra.mxu0 0.0
      %1662 = vmatpush.msra.mxu0 0.0
      %1663 = vmatpush.msra.mxu0 0.0
      %1664 = vmatpush.msra.mxu0 0.0
      %1665 = vmatpush.msra.mxu0 0.0
      %1666 = vmatpush.msra.mxu0 %v1608
      %1667 = vmatpush.msra.mxu0 %v1607
      %1668 = vmatpush.msra.mxu0 %v1606
      %1669 = vmatpush.msra.mxu0 %v1605
      %1670 = vmatpush.msra.mxu0 %v1604
      %1671 = vmatpush.msra.mxu0 %v1603
      %1672 = vmatpush.msra.mxu0 %v1602
      %1673 = vmatmul.f32.gmra.mxu0 %v1610
      %v1674 = vpop.f32.mrf.mxu0
      %v1675 = vadd.f32 0.0, %v1674
      %1676 = vmatmul.f32.gmra.mxu0 %v1613
      %v1677 = vpop.f32.mrf.mxu0
      %v1678 = vadd.f32 0.0, %v1677
      %1679 = vmatmul.f32.gmra.mxu0 %v1616
      %v1680 = vpop.f32.mrf.mxu0
      %v1681 = vadd.f32 0.0, %v1680
      %1682 = vmatmul.f32.gmra.mxu0 %v1619
      %v1683 = vpop.f32.mrf.mxu0
      %v1684 = vadd.f32 0.0, %v1683
      %1685 = vmatmul.f32.gmra.mxu0 %v1622
      %v1686 = vpop.f32.mrf.mxu0
      %v1687 = vadd.f32 0.0, %v1686
      %1688 = vmatmul.f32.gmra.mxu0 %v1625
      %v1689 = vpop.f32.mrf.mxu0
      %v1690 = vadd.f32 0.0, %v1689
      %1691 = vmatmul.f32.gmra.mxu0 %v1628
      %v1692 = vpop.f32.mrf.mxu0
      %v1693 = vadd.f32 0.0, %v1692
      %1694 = vmatmul.f32.gmra.mxu0 %v1631
      %v1695 = vpop.f32.mrf.mxu0
      %v1696 = vadd.f32 0.0, %v1695
      %1697 = vmatmul.f32.gmra.mxu0 %v1634
      %v1698 = vpop.f32.mrf.mxu0
      %v1699 = vadd.f32 0.0, %v1698
      %1700 = vmatmul.f32.gmra.mxu0 %v1637
      %v1701 = vpop.f32.mrf.mxu0
      %v1702 = vadd.f32 0.0, %v1701
      %1703 = vmatmul.f32.gmra.mxu0 %v1640
      %v1704 = vpop.f32.mrf.mxu0
      %v1705 = vadd.f32 0.0, %v1704
      %1706 = vmatmul.f32.gmra.mxu0 %v1643
      %v1707 = vpop.f32.mrf.mxu0
      %v1708 = vadd.f32 0.0, %v1707
      %1709 = vmatmul.f32.gmra.mxu0 %v1646
      %v1710 = vpop.f32.mrf.mxu0
      %v1711 = vadd.f32 0.0, %v1710
      %1712 = vmatmul.f32.gmra.mxu0 %v1649
      %v1713 = vpop.f32.mrf.mxu0
      %v1714 = vadd.f32 0.0, %v1713
      %1715 = vmatmul.f32.gmra.mxu0 %v1652
      %v1716 = vpop.f32.mrf.mxu0
      %v1717 = vadd.f32 0.0, %v1716
      %1718 = vmatmul.f32.gmra.mxu0 %v1655
      %v1719 = vpop.f32.mrf.mxu0
      %v1720 = vadd.f32 0.0, %v1719
      %1721 = vdwg.mxu0
      %v1722 = vadd.f32 %v1503, %v1675
      %v1723 = vadd.f32 %v1504, %v1678
      %v1724 = vadd.f32 %v1505, %v1681
      %v1725 = vadd.f32 %v1506, %v1684
      %v1726 = vadd.f32 %v1507, %v1687
      %v1727 = vadd.f32 %v1508, %v1690
      %v1728 = vadd.f32 %v1509, %v1693
      %v1729 = vadd.f32 %v1510, %v1696
      %v1730 = vadd.f32 %v1511, %v1699
      %v1731 = vadd.f32 %v1512, %v1702
      %v1732 = vadd.f32 %v1513, %v1705
      %v1733 = vadd.f32 %v1514, %v1708
      %v1734 = vadd.f32 %v1515, %v1711
      %v1735 = vadd.f32 %v1516, %v1714
      %v1736 = vadd.f32 %v1517, %v1717
      %v1737 = vadd.f32 %v1518, %v1720
      %s1738 = scalar_lea.vmem %s4, 256
      %v1739 = vld [vmem:[%s1738] sm:$0xff]
      %v1740 = vld [vmem:[%s1738 + $0x8] sm:$0xff]
      %v1741 = vld [vmem:[%s1738 + $0x10] sm:$0xff]
      %v1742 = vld [vmem:[%s1738 + $0x18] sm:$0xff]
      %v1743 = vld [vmem:[%s1738 + $0x20] sm:$0xff]
      %v1744 = vld [vmem:[%s1738 + $0x28] sm:$0xff]
      %v1745 = vld [vmem:[%s1738 + $0x30] sm:$0xff]
      %v1746 = vld [vmem:[%s1738 + $0x38] sm:$0xff]
      %v1747 = vld [vmem:[%s1738 + $0x40] sm:$0xff]
      %v1748 = vld [vmem:[%s1738 + $0x48] sm:$0xff]
      %v1749 = vld [vmem:[%s1738 + $0x50] sm:$0xff]
      %v1750 = vld [vmem:[%s1738 + $0x58] sm:$0xff]
      %v1751 = vld [vmem:[%s1738 + $0x60] sm:$0xff]
      %v1752 = vld [vmem:[%s1738 + $0x68] sm:$0xff]
      %v1753 = vld [vmem:[%s1738 + $0x70] sm:$0xff]
      %v1754 = vld [vmem:[%s1738 + $0x78] sm:$0xff]
      %1755 = vmatpush.msra.mxu0 %v1204
      %1756 = vmatpush.msra.mxu0 %v1203
      %1757 = vmatpush.msra.mxu0 %v1202
      %1758 = vmatpush.msra.mxu0 %v1201
      %1759 = vmatpush.msra.mxu0 %v1200
      %1760 = vmatpush.msra.mxu0 %v1199
      %1761 = vmatpush.msra.mxu0 %v1198
      %1762 = vmatpush.msra.mxu0 %v1197
      %1763 = vmatpush.msra.mxu0 %v1196
      %1764 = vmatpush.msra.mxu0 %v1195
      %1765 = vmatpush.msra.mxu0 %v1194
      %1766 = vmatpush.msra.mxu0 %v1193
      %1767 = vmatpush.msra.mxu0 %v1192
      %1768 = vmatpush.msra.mxu0 %v1191
      %1769 = vmatpush.msra.mxu0 %v1190
      %1770 = vmatpush.msra.mxu0 %v1189
      %1771 = vmatmul.f32.gmra.mxu0 %v1739
      %v1772 = vpop.f32.mrf.mxu0
      %v1773 = vadd.f32 0.0, %v1772
      %1774 = vmatmul.f32.gmra.mxu0 %v1740
      %v1775 = vpop.f32.mrf.mxu0
      %v1776 = vadd.f32 0.0, %v1775
      %1777 = vmatmul.f32.gmra.mxu0 %v1741
      %v1778 = vpop.f32.mrf.mxu0
      %v1779 = vadd.f32 0.0, %v1778
      %1780 = vmatmul.f32.gmra.mxu0 %v1742
      %v1781 = vpop.f32.mrf.mxu0
      %v1782 = vadd.f32 0.0, %v1781
      %1783 = vmatmul.f32.gmra.mxu0 %v1743
      %v1784 = vpop.f32.mrf.mxu0
      %v1785 = vadd.f32 0.0, %v1784
      %1786 = vmatmul.f32.gmra.mxu0 %v1744
      %v1787 = vpop.f32.mrf.mxu0
      %v1788 = vadd.f32 0.0, %v1787
      %1789 = vmatmul.f32.gmra.mxu0 %v1745
      %v1790 = vpop.f32.mrf.mxu0
      %v1791 = vadd.f32 0.0, %v1790
      %1792 = vmatmul.f32.gmra.mxu0 %v1746
      %v1793 = vpop.f32.mrf.mxu0
      %v1794 = vadd.f32 0.0, %v1793
      %1795 = vmatmul.f32.gmra.mxu0 %v1747
      %v1796 = vpop.f32.mrf.mxu0
      %v1797 = vadd.f32 0.0, %v1796
      %1798 = vmatmul.f32.gmra.mxu0 %v1748
      %v1799 = vpop.f32.mrf.mxu0
      %v1800 = vadd.f32 0.0, %v1799
      %1801 = vmatmul.f32.gmra.mxu0 %v1749
      %v1802 = vpop.f32.mrf.mxu0
      %v1803 = vadd.f32 0.0, %v1802
      %1804 = vmatmul.f32.gmra.mxu0 %v1750
      %v1805 = vpop.f32.mrf.mxu0
      %v1806 = vadd.f32 0.0, %v1805
      %1807 = vmatmul.f32.gmra.mxu0 %v1751
      %v1808 = vpop.f32.mrf.mxu0
      %v1809 = vadd.f32 0.0, %v1808
      %1810 = vmatmul.f32.gmra.mxu0 %v1752
      %v1811 = vpop.f32.mrf.mxu0
      %v1812 = vadd.f32 0.0, %v1811
      %1813 = vmatmul.f32.gmra.mxu0 %v1753
      %v1814 = vpop.f32.mrf.mxu0
      %v1815 = vadd.f32 0.0, %v1814
      %1816 = vmatmul.f32.gmra.mxu0 %v1754
      %v1817 = vpop.f32.mrf.mxu0
      %v1818 = vadd.f32 0.0, %v1817
      %1819 = vdwg.mxu0
      %s1820 = scalar_lea.vmem %s6, 112
      %v1821 = vld [vmem:[%s1820] sm:$0xff]
      %v1822 = vld [vmem:[%s1820 + $0x8] sm:$0xff]
      %v1823 = vld [vmem:[%s1820 + $0x10] sm:$0xff]
      %v1824 = vld [vmem:[%s1820 + $0x18] sm:$0xff]
      %v1825 = vld [vmem:[%s1820 + $0x20] sm:$0xff]
      %v1826 = vld [vmem:[%s1820 + $0x28] sm:$0xff]
      %v1827 = vld [vmem:[%s1820 + $0x30] sm:$0xff]
      %v1829 = vsel %vm1309, %v1773, 0
      %v1832 = vsel %vm1309, %v1776, 0
      %v1835 = vsel %vm1309, %v1779, 0
      %v1838 = vsel %vm1309, %v1782, 0
      %v1841 = vsel %vm1309, %v1785, 0
      %v1844 = vsel %vm1309, %v1788, 0
      %v1847 = vsel %vm1309, %v1791, 0
      %v1850 = vsel %vm1309, %v1794, 0
      %v1853 = vsel %vm1309, %v1797, 0
      %v1856 = vsel %vm1309, %v1800, 0
      %v1859 = vsel %vm1309, %v1803, 0
      %v1862 = vsel %vm1309, %v1806, 0
      %v1865 = vsel %vm1309, %v1809, 0
      %v1868 = vsel %vm1309, %v1812, 0
      %v1871 = vsel %vm1309, %v1815, 0
      %v1874 = vsel %vm1309, %v1818, 0
      %1876 = vmatpush.msra.mxu0 0.0
      %1877 = vmatpush.msra.mxu0 0.0
      %1878 = vmatpush.msra.mxu0 0.0
      %1879 = vmatpush.msra.mxu0 0.0
      %1880 = vmatpush.msra.mxu0 0.0
      %1881 = vmatpush.msra.mxu0 0.0
      %1882 = vmatpush.msra.mxu0 0.0
      %1883 = vmatpush.msra.mxu0 0.0
      %1884 = vmatpush.msra.mxu0 0.0
      %1885 = vmatpush.msra.mxu0 %v1827
      %1886 = vmatpush.msra.mxu0 %v1826
      %1887 = vmatpush.msra.mxu0 %v1825
      %1888 = vmatpush.msra.mxu0 %v1824
      %1889 = vmatpush.msra.mxu0 %v1823
      %1890 = vmatpush.msra.mxu0 %v1822
      %1891 = vmatpush.msra.mxu0 %v1821
      %1892 = vmatmul.f32.gmra.mxu0 %v1829
      %v1893 = vpop.f32.mrf.mxu0
      %v1894 = vadd.f32 0.0, %v1893
      %1895 = vmatmul.f32.gmra.mxu0 %v1832
      %v1896 = vpop.f32.mrf.mxu0
      %v1897 = vadd.f32 0.0, %v1896
      %1898 = vmatmul.f32.gmra.mxu0 %v1835
      %v1899 = vpop.f32.mrf.mxu0
      %v1900 = vadd.f32 0.0, %v1899
      %1901 = vmatmul.f32.gmra.mxu0 %v1838
      %v1902 = vpop.f32.mrf.mxu0
      %v1903 = vadd.f32 0.0, %v1902
      %1904 = vmatmul.f32.gmra.mxu0 %v1841
      %v1905 = vpop.f32.mrf.mxu0
      %v1906 = vadd.f32 0.0, %v1905
      %1907 = vmatmul.f32.gmra.mxu0 %v1844
      %v1908 = vpop.f32.mrf.mxu0
      %v1909 = vadd.f32 0.0, %v1908
      %1910 = vmatmul.f32.gmra.mxu0 %v1847
      %v1911 = vpop.f32.mrf.mxu0
      %v1912 = vadd.f32 0.0, %v1911
      %1913 = vmatmul.f32.gmra.mxu0 %v1850
      %v1914 = vpop.f32.mrf.mxu0
      %v1915 = vadd.f32 0.0, %v1914
      %1916 = vmatmul.f32.gmra.mxu0 %v1853
      %v1917 = vpop.f32.mrf.mxu0
      %v1918 = vadd.f32 0.0, %v1917
      %1919 = vmatmul.f32.gmra.mxu0 %v1856
      %v1920 = vpop.f32.mrf.mxu0
      %v1921 = vadd.f32 0.0, %v1920
      %1922 = vmatmul.f32.gmra.mxu0 %v1859
      %v1923 = vpop.f32.mrf.mxu0
      %v1924 = vadd.f32 0.0, %v1923
      %1925 = vmatmul.f32.gmra.mxu0 %v1862
      %v1926 = vpop.f32.mrf.mxu0
      %v1927 = vadd.f32 0.0, %v1926
      %1928 = vmatmul.f32.gmra.mxu0 %v1865
      %v1929 = vpop.f32.mrf.mxu0
      %v1930 = vadd.f32 0.0, %v1929
      %1931 = vmatmul.f32.gmra.mxu0 %v1868
      %v1932 = vpop.f32.mrf.mxu0
      %v1933 = vadd.f32 0.0, %v1932
      %1934 = vmatmul.f32.gmra.mxu0 %v1871
      %v1935 = vpop.f32.mrf.mxu0
      %v1936 = vadd.f32 0.0, %v1935
      %1937 = vmatmul.f32.gmra.mxu0 %v1874
      %v1938 = vpop.f32.mrf.mxu0
      %v1939 = vadd.f32 0.0, %v1938
      %1940 = vdwg.mxu0
      %v1941 = vadd.f32 %v1722, %v1894
      %v1942 = vadd.f32 %v1723, %v1897
      %v1943 = vadd.f32 %v1724, %v1900
      %v1944 = vadd.f32 %v1725, %v1903
      %v1945 = vadd.f32 %v1726, %v1906
      %v1946 = vadd.f32 %v1727, %v1909
      %v1947 = vadd.f32 %v1728, %v1912
      %v1948 = vadd.f32 %v1729, %v1915
      %v1949 = vadd.f32 %v1730, %v1918
      %v1950 = vadd.f32 %v1731, %v1921
      %v1951 = vadd.f32 %v1732, %v1924
      %v1952 = vadd.f32 %v1733, %v1927
      %v1953 = vadd.f32 %v1734, %v1930
      %v1954 = vadd.f32 %v1735, %v1933
      %v1955 = vadd.f32 %v1736, %v1936
      %v1956 = vadd.f32 %v1737, %v1939
      %vm1957 = vcmp.gt.f32.partialorder %v1941, 0.0
      %vm1958 = vcmp.gt.f32.partialorder %v1942, 0.0
      %vm1959 = vcmp.gt.f32.partialorder %v1943, 0.0
      %vm1960 = vcmp.gt.f32.partialorder %v1944, 0.0
      %vm1961 = vcmp.gt.f32.partialorder %v1945, 0.0
      %vm1962 = vcmp.gt.f32.partialorder %v1946, 0.0
      %vm1963 = vcmp.gt.f32.partialorder %v1947, 0.0
      %vm1964 = vcmp.gt.f32.partialorder %v1948, 0.0
      %vm1965 = vcmp.gt.f32.partialorder %v1949, 0.0
      %vm1966 = vcmp.gt.f32.partialorder %v1950, 0.0
      %vm1967 = vcmp.gt.f32.partialorder %v1951, 0.0
      %vm1968 = vcmp.gt.f32.partialorder %v1952, 0.0
      %vm1969 = vcmp.gt.f32.partialorder %v1953, 0.0
      %vm1970 = vcmp.gt.f32.partialorder %v1954, 0.0
      %vm1971 = vcmp.gt.f32.partialorder %v1955, 0.0
      %vm1972 = vcmp.gt.f32.partialorder %v1956, 0.0
      %v1973 = vmul.f32 %v1941, 1.442695
      %v1974 = vpow.pop %v1973
      %v1975 = vmul.f32 %v1942, 1.442695
      %v1976 = vpow.pop %v1975
      %v1977 = vmul.f32 %v1943, 1.442695
      %v1978 = vpow.pop %v1977
      %v1979 = vmul.f32 %v1944, 1.442695
      %v1980 = vpow.pop %v1979
      %v1981 = vmul.f32 %v1945, 1.442695
      %v1982 = vpow.pop %v1981
      %v1983 = vmul.f32 %v1946, 1.442695
      %v1984 = vpow.pop %v1983
      %v1985 = vmul.f32 %v1947, 1.442695
      %v1986 = vpow.pop %v1985
      %v1987 = vmul.f32 %v1948, 1.442695
      %v1988 = vpow.pop %v1987
      %v1989 = vmul.f32 %v1949, 1.442695
      %v1990 = vpow.pop %v1989
      %v1991 = vmul.f32 %v1950, 1.442695
      %v1992 = vpow.pop %v1991
      %v1993 = vmul.f32 %v1951, 1.442695
      %v1994 = vpow.pop %v1993
      %v1995 = vmul.f32 %v1952, 1.442695
      %v1996 = vpow.pop %v1995
      %v1997 = vmul.f32 %v1953, 1.442695
      %v1998 = vpow.pop %v1997
      %v1999 = vmul.f32 %v1954, 1.442695
      %v2000 = vpow.pop %v1999
      %v2001 = vmul.f32 %v1955, 1.442695
      %v2002 = vpow.pop %v2001
      %v2003 = vmul.f32 %v1956, 1.442695
      %v2004 = vpow.pop %v2003
      %v2005 = vsub.f32 %v1974, 1.0
      %v2006 = vsub.f32 %v1976, 1.0
      %v2007 = vsub.f32 %v1978, 1.0
      %v2008 = vsub.f32 %v1980, 1.0
      %v2009 = vsub.f32 %v1982, 1.0
      %v2010 = vsub.f32 %v1984, 1.0
      %v2011 = vsub.f32 %v1986, 1.0
      %v2012 = vsub.f32 %v1988, 1.0
      %v2013 = vsub.f32 %v1990, 1.0
      %v2014 = vsub.f32 %v1992, 1.0
      %v2015 = vsub.f32 %v1994, 1.0
      %v2016 = vsub.f32 %v1996, 1.0
      %v2017 = vsub.f32 %v1998, 1.0
      %v2018 = vsub.f32 %v2000, 1.0
      %v2019 = vsub.f32 %v2002, 1.0
      %v2020 = vsub.f32 %v2004, 1.0
      %v2021 = vsel %vm1957, %v1941, %v2005
      %v2022 = vsel %vm1958, %v1942, %v2006
      %v2023 = vsel %vm1959, %v1943, %v2007
      %v2024 = vsel %vm1960, %v1944, %v2008
      %v2025 = vsel %vm1961, %v1945, %v2009
      %v2026 = vsel %vm1962, %v1946, %v2010
      %v2027 = vsel %vm1963, %v1947, %v2011
      %v2028 = vsel %vm1964, %v1948, %v2012
      %v2029 = vsel %vm1965, %v1949, %v2013
      %v2030 = vsel %vm1966, %v1950, %v2014
      %v2031 = vsel %vm1967, %v1951, %v2015
      %v2032 = vsel %vm1968, %v1952, %v2016
      %v2033 = vsel %vm1969, %v1953, %v2017
      %v2034 = vsel %vm1970, %v1954, %v2018
      %v2035 = vsel %vm1971, %v1955, %v2019
      %v2036 = vsel %vm1972, %v1956, %v2020
      %v2037 = vld [vmem:[#allocation2] sm:$0x1]
      %v2038 = vld [vmem:[%s7] sm:$0x1]
      %2039 = vmatpush.msra.mxu0 %v2036
      %2040 = vmatpush.msra.mxu0 %v2035
      %2041 = vmatpush.msra.mxu0 %v2034
      %2042 = vmatpush.msra.mxu0 %v2033
      %2043 = vmatpush.msra.mxu0 %v2032
      %2044 = vmatpush.msra.mxu0 %v2031
      %2045 = vmatpush.msra.mxu0 %v2030
      %2046 = vmatpush.msra.mxu0 %v2029
      %2047 = vmatpush.msra.mxu0 %v2028
      %2048 = vmatpush.msra.mxu0 %v2027
      %2049 = vmatpush.msra.mxu0 %v2026
      %2050 = vmatpush.msra.mxu0 %v2025
      %2051 = vmatpush.msra.mxu0 %v2024
      %2052 = vmatpush.msra.mxu0 %v2023
      %2053 = vmatpush.msra.mxu0 %v2022
      %2054 = vmatpush.msra.mxu0 %v2021
      %2055 = vmatmul.f32.gmra.mxu0 %v2038
      %v2056 = vpop.f32.mrf.mxu0
      %v2057 = vadd.f32 0.0, %v2056
      %2058 = vdwg.mxu0
      %v2059 = vld [vmem:[%s9] sm:$0xff]
      %v2060 = vld [vmem:[%s9 + $0x8] sm:$0xff]
      %v2061 = vld [vmem:[%s9 + $0x10] sm:$0xff]
      %v2062 = vld [vmem:[%s9 + $0x18] sm:$0xff]
      %v2063 = vld [vmem:[%s9 + $0x20] sm:$0xff]
      %v2064 = vld [vmem:[%s9 + $0x28] sm:$0xff]
      %v2065 = vld [vmem:[%s9 + $0x30] sm:$0xff]
      %v2066 = vld [vmem:[%s9 + $0x38] sm:$0xff]
      %v2067 = vld [vmem:[%s9 + $0x40] sm:$0xff]
      %v2068 = vld [vmem:[%s9 + $0x48] sm:$0xff]
      %v2069 = vld [vmem:[%s9 + $0x50] sm:$0xff]
      %v2070 = vld [vmem:[%s9 + $0x58] sm:$0xff]
      %v2071 = vld [vmem:[%s9 + $0x60] sm:$0xff]
      %v2072 = vld [vmem:[%s9 + $0x68] sm:$0xff]
      %v2073 = vld [vmem:[%s9 + $0x70] sm:$0xff]
      %v2074 = vld [vmem:[%s9 + $0x78] sm:$0xff]
      %v2075 = vld [vmem:[%s9 + $0x80] sm:$0xff]
      %v2076 = vld [vmem:[%s9 + $0x88] sm:$0xff]
      %v2077 = vld [vmem:[%s9 + $0x90] sm:$0xff]
      %v2078 = vld [vmem:[%s9 + $0x98] sm:$0xff]
      %v2079 = vld [vmem:[%s9 + $0xa0] sm:$0xff]
      %v2080 = vld [vmem:[%s9 + $0xa8] sm:$0xff]
      %v2081 = vld [vmem:[%s9 + $0xb0] sm:$0xff]
      %v2082 = vld [vmem:[%s9 + $0xb8] sm:$0xff]
      %v2083 = vld [vmem:[%s9 + $0xc0] sm:$0xff]
      %v2084 = vld [vmem:[%s9 + $0xc8] sm:$0xff]
      %v2085 = vld [vmem:[%s9 + $0xd0] sm:$0xff]
      %v2086 = vld [vmem:[%s9 + $0xd8] sm:$0xff]
      %v2087 = vld [vmem:[%s9 + $0xe0] sm:$0xff]
      %v2088 = vld [vmem:[%s9 + $0xe8] sm:$0xff]
      %vm2089 = vcmask 982016
      %v2091 = vsel %vm2089, %v2057, 0
      %2093 = vmatpush.msra.mxu0 0.0
      %2094 = vmatpush.msra.mxu0 %v2087
      %2095 = vmatpush.msra.mxu0 %v2085
      %2096 = vmatpush.msra.mxu0 %v2083
      %2097 = vmatpush.msra.mxu0 %v2081
      %2098 = vmatpush.msra.mxu0 %v2079
      %2099 = vmatpush.msra.mxu0 %v2077
      %2100 = vmatpush.msra.mxu0 %v2075
      %2101 = vmatpush.msra.mxu0 %v2073
      %2102 = vmatpush.msra.mxu0 %v2071
      %2103 = vmatpush.msra.mxu0 %v2069
      %2104 = vmatpush.msra.mxu0 %v2067
      %2105 = vmatpush.msra.mxu0 %v2065
      %2106 = vmatpush.msra.mxu0 %v2063
      %2107 = vmatpush.msra.mxu0 %v2061
      %2108 = vmatpush.msra.mxu0 %v2059
      %2109 = vmatmul.f32.gmra.mxu0 %v2091
      %v2110 = vpop.f32.mrf.mxu0
      %v2111 = vadd.f32 0.0, %v2110
      %2112 = vdwg.mxu0
      %2113 = vmatpush.msra.mxu0 0.0
      %2114 = vmatpush.msra.mxu0 %v2088
      %2115 = vmatpush.msra.mxu0 %v2086
      %2116 = vmatpush.msra.mxu0 %v2084
      %2117 = vmatpush.msra.mxu0 %v2082
      %2118 = vmatpush.msra.mxu0 %v2080
      %2119 = vmatpush.msra.mxu0 %v2078
      %2120 = vmatpush.msra.mxu0 %v2076
      %2121 = vmatpush.msra.mxu0 %v2074
      %2122 = vmatpush.msra.mxu0 %v2072
      %2123 = vmatpush.msra.mxu0 %v2070
      %2124 = vmatpush.msra.mxu0 %v2068
      %2125 = vmatpush.msra.mxu0 %v2066
      %2126 = vmatpush.msra.mxu0 %v2064
      %2127 = vmatpush.msra.mxu0 %v2062
      %2128 = vmatpush.msra.mxu0 %v2060
      %2129 = vmatmul.f32.gmra.mxu0 %v2091
      %v2130 = vpop.f32.mrf.mxu0
      %v2131 = vadd.f32 0.0, %v2130
      %2132 = vdwg.mxu0
      %2134 = vset.pattern.permute.xlu0 0
      %2135 = vperm.xlu0 %2134, %v2037
      %v2136 = vpop.permute.xlu0 %2135
      %v2138 = vperm.slane %v2136, 0
      %v2139 = vadd.f32 %v2138, %v2111
      %v2140 = vadd.f32 %v2138, %v2131
      %s2141 = scalar_lea.vmem %s7, 1
      %v2142 = vld [vmem:[%s2141] sm:$0x1]
      %2143 = vmatpush.msra.mxu0 %v2036
      %2144 = vmatpush.msra.mxu0 %v2035
      %2145 = vmatpush.msra.mxu0 %v2034
      %2146 = vmatpush.msra.mxu0 %v2033
      %2147 = vmatpush.msra.mxu0 %v2032
      %2148 = vmatpush.msra.mxu0 %v2031
      %2149 = vmatpush.msra.mxu0 %v2030
      %2150 = vmatpush.msra.mxu0 %v2029
      %2151 = vmatpush.msra.mxu0 %v2028
      %2152 = vmatpush.msra.mxu0 %v2027
      %2153 = vmatpush.msra.mxu0 %v2026
      %2154 = vmatpush.msra.mxu0 %v2025
      %2155 = vmatpush.msra.mxu0 %v2024
      %2156 = vmatpush.msra.mxu0 %v2023
      %2157 = vmatpush.msra.mxu0 %v2022
      %2158 = vmatpush.msra.mxu0 %v2021
      %2159 = vmatmul.f32.gmra.mxu0 %v2142
      %v2160 = vpop.f32.mrf.mxu0
      %v2161 = vadd.f32 0.0, %v2160
      %2162 = vdwg.mxu0
      %s2163 = scalar_lea.vmem %s9, 240
      %v2164 = vld [vmem:[%s2163] sm:$0xff]
      %v2165 = vld [vmem:[%s2163 + $0x8] sm:$0xff]
      %v2166 = vld [vmem:[%s2163 + $0x10] sm:$0xff]
      %v2167 = vld [vmem:[%s2163 + $0x18] sm:$0xff]
      %v2168 = vld [vmem:[%s2163 + $0x20] sm:$0xff]
      %v2169 = vld [vmem:[%s2163 + $0x28] sm:$0xff]
      %v2170 = vld [vmem:[%s2163 + $0x30] sm:$0xff]
      %v2171 = vld [vmem:[%s2163 + $0x38] sm:$0xff]
      %v2172 = vld [vmem:[%s2163 + $0x40] sm:$0xff]
      %v2173 = vld [vmem:[%s2163 + $0x48] sm:$0xff]
      %v2174 = vld [vmem:[%s2163 + $0x50] sm:$0xff]
      %v2175 = vld [vmem:[%s2163 + $0x58] sm:$0xff]
      %v2176 = vld [vmem:[%s2163 + $0x60] sm:$0xff]
      %v2177 = vld [vmem:[%s2163 + $0x68] sm:$0xff]
      %v2178 = vld [vmem:[%s2163 + $0x70] sm:$0xff]
      %v2179 = vld [vmem:[%s2163 + $0x78] sm:$0xff]
      %v2180 = vld [vmem:[%s2163 + $0x80] sm:$0xff]
      %v2181 = vld [vmem:[%s2163 + $0x88] sm:$0xff]
      %v2182 = vld [vmem:[%s2163 + $0x90] sm:$0xff]
      %v2183 = vld [vmem:[%s2163 + $0x98] sm:$0xff]
      %v2184 = vld [vmem:[%s2163 + $0xa0] sm:$0xff]
      %v2185 = vld [vmem:[%s2163 + $0xa8] sm:$0xff]
      %v2186 = vld [vmem:[%s2163 + $0xb0] sm:$0xff]
      %v2187 = vld [vmem:[%s2163 + $0xb8] sm:$0xff]
      %v2188 = vld [vmem:[%s2163 + $0xc0] sm:$0xff]
      %v2189 = vld [vmem:[%s2163 + $0xc8] sm:$0xff]
      %v2190 = vld [vmem:[%s2163 + $0xd0] sm:$0xff]
      %v2191 = vld [vmem:[%s2163 + $0xd8] sm:$0xff]
      %v2192 = vld [vmem:[%s2163 + $0xe0] sm:$0xff]
      %v2193 = vld [vmem:[%s2163 + $0xe8] sm:$0xff]
      %v2195 = vsel %vm2089, %v2161, 0
      %2197 = vmatpush.msra.mxu0 0.0
      %2198 = vmatpush.msra.mxu0 %v2192
      %2199 = vmatpush.msra.mxu0 %v2190
      %2200 = vmatpush.msra.mxu0 %v2188
      %2201 = vmatpush.msra.mxu0 %v2186
      %2202 = vmatpush.msra.mxu0 %v2184
      %2203 = vmatpush.msra.mxu0 %v2182
      %2204 = vmatpush.msra.mxu0 %v2180
      %2205 = vmatpush.msra.mxu0 %v2178
      %2206 = vmatpush.msra.mxu0 %v2176
      %2207 = vmatpush.msra.mxu0 %v2174
      %2208 = vmatpush.msra.mxu0 %v2172
      %2209 = vmatpush.msra.mxu0 %v2170
      %2210 = vmatpush.msra.mxu0 %v2168
      %2211 = vmatpush.msra.mxu0 %v2166
      %2212 = vmatpush.msra.mxu0 %v2164
      %2213 = vmatmul.f32.gmra.mxu0 %v2195
      %v2214 = vpop.f32.mrf.mxu0
      %v2215 = vadd.f32 0.0, %v2214
      %2216 = vdwg.mxu0
      %2217 = vmatpush.msra.mxu0 0.0
      %2218 = vmatpush.msra.mxu0 %v2193
      %2219 = vmatpush.msra.mxu0 %v2191
      %2220 = vmatpush.msra.mxu0 %v2189
      %2221 = vmatpush.msra.mxu0 %v2187
      %2222 = vmatpush.msra.mxu0 %v2185
      %2223 = vmatpush.msra.mxu0 %v2183
      %2224 = vmatpush.msra.mxu0 %v2181
      %2225 = vmatpush.msra.mxu0 %v2179
      %2226 = vmatpush.msra.mxu0 %v2177
      %2227 = vmatpush.msra.mxu0 %v2175
      %2228 = vmatpush.msra.mxu0 %v2173
      %2229 = vmatpush.msra.mxu0 %v2171
      %2230 = vmatpush.msra.mxu0 %v2169
      %2231 = vmatpush.msra.mxu0 %v2167
      %2232 = vmatpush.msra.mxu0 %v2165
      %2233 = vmatmul.f32.gmra.mxu0 %v2195
      %v2234 = vpop.f32.mrf.mxu0
      %v2235 = vadd.f32 0.0, %v2234
      %2236 = vdwg.mxu0
      %v2237 = vadd.f32 %v2139, %v2215
      %v2238 = vadd.f32 %v2140, %v2235
      %s2239 = scalar_lea.vmem %s7, 2
      %v2240 = vld [vmem:[%s2239] sm:$0x1]
      %2241 = vmatpush.msra.mxu0 %v2036
      %2242 = vmatpush.msra.mxu0 %v2035
      %2243 = vmatpush.msra.mxu0 %v2034
      %2244 = vmatpush.msra.mxu0 %v2033
      %2245 = vmatpush.msra.mxu0 %v2032
      %2246 = vmatpush.msra.mxu0 %v2031
      %2247 = vmatpush.msra.mxu0 %v2030
      %2248 = vmatpush.msra.mxu0 %v2029
      %2249 = vmatpush.msra.mxu0 %v2028
      %2250 = vmatpush.msra.mxu0 %v2027
      %2251 = vmatpush.msra.mxu0 %v2026
      %2252 = vmatpush.msra.mxu0 %v2025
      %2253 = vmatpush.msra.mxu0 %v2024
      %2254 = vmatpush.msra.mxu0 %v2023
      %2255 = vmatpush.msra.mxu0 %v2022
      %2256 = vmatpush.msra.mxu0 %v2021
      %2257 = vmatmul.f32.gmra.mxu0 %v2240
      %v2258 = vpop.f32.mrf.mxu0
      %v2259 = vadd.f32 0.0, %v2258
      %2260 = vdwg.mxu0
      %s2261 = scalar_lea.vmem %s9, 480
      %v2262 = vld [vmem:[%s2261] sm:$0xff]
      %v2263 = vld [vmem:[%s2261 + $0x8] sm:$0xff]
      %v2264 = vld [vmem:[%s2261 + $0x10] sm:$0xff]
      %v2265 = vld [vmem:[%s2261 + $0x18] sm:$0xff]
      %v2266 = vld [vmem:[%s2261 + $0x20] sm:$0xff]
      %v2267 = vld [vmem:[%s2261 + $0x28] sm:$0xff]
      %v2268 = vld [vmem:[%s2261 + $0x30] sm:$0xff]
      %v2269 = vld [vmem:[%s2261 + $0x38] sm:$0xff]
      %v2270 = vld [vmem:[%s2261 + $0x40] sm:$0xff]
      %v2271 = vld [vmem:[%s2261 + $0x48] sm:$0xff]
      %v2272 = vld [vmem:[%s2261 + $0x50] sm:$0xff]
      %v2273 = vld [vmem:[%s2261 + $0x58] sm:$0xff]
      %v2274 = vld [vmem:[%s2261 + $0x60] sm:$0xff]
      %v2275 = vld [vmem:[%s2261 + $0x68] sm:$0xff]
      %v2276 = vld [vmem:[%s2261 + $0x70] sm:$0xff]
      %v2277 = vld [vmem:[%s2261 + $0x78] sm:$0xff]
      %v2278 = vld [vmem:[%s2261 + $0x80] sm:$0xff]
      %v2279 = vld [vmem:[%s2261 + $0x88] sm:$0xff]
      %v2280 = vld [vmem:[%s2261 + $0x90] sm:$0xff]
      %v2281 = vld [vmem:[%s2261 + $0x98] sm:$0xff]
      %v2282 = vld [vmem:[%s2261 + $0xa0] sm:$0xff]
      %v2283 = vld [vmem:[%s2261 + $0xa8] sm:$0xff]
      %v2284 = vld [vmem:[%s2261 + $0xb0] sm:$0xff]
      %v2285 = vld [vmem:[%s2261 + $0xb8] sm:$0xff]
      %v2286 = vld [vmem:[%s2261 + $0xc0] sm:$0xff]
      %v2287 = vld [vmem:[%s2261 + $0xc8] sm:$0xff]
      %v2288 = vld [vmem:[%s2261 + $0xd0] sm:$0xff]
      %v2289 = vld [vmem:[%s2261 + $0xd8] sm:$0xff]
      %v2290 = vld [vmem:[%s2261 + $0xe0] sm:$0xff]
      %v2291 = vld [vmem:[%s2261 + $0xe8] sm:$0xff]
      %v2293 = vsel %vm2089, %v2259, 0
      %2295 = vmatpush.msra.mxu0 0.0
      %2296 = vmatpush.msra.mxu0 %v2290
      %2297 = vmatpush.msra.mxu0 %v2288
      %2298 = vmatpush.msra.mxu0 %v2286
      %2299 = vmatpush.msra.mxu0 %v2284
      %2300 = vmatpush.msra.mxu0 %v2282
      %2301 = vmatpush.msra.mxu0 %v2280
      %2302 = vmatpush.msra.mxu0 %v2278
      %2303 = vmatpush.msra.mxu0 %v2276
      %2304 = vmatpush.msra.mxu0 %v2274
      %2305 = vmatpush.msra.mxu0 %v2272
      %2306 = vmatpush.msra.mxu0 %v2270
      %2307 = vmatpush.msra.mxu0 %v2268
      %2308 = vmatpush.msra.mxu0 %v2266
      %2309 = vmatpush.msra.mxu0 %v2264
      %2310 = vmatpush.msra.mxu0 %v2262
      %2311 = vmatmul.f32.gmra.mxu0 %v2293
      %v2312 = vpop.f32.mrf.mxu0
      %v2313 = vadd.f32 0.0, %v2312
      %2314 = vdwg.mxu0
      %2315 = vmatpush.msra.mxu0 0.0
      %2316 = vmatpush.msra.mxu0 %v2291
      %2317 = vmatpush.msra.mxu0 %v2289
      %2318 = vmatpush.msra.mxu0 %v2287
      %2319 = vmatpush.msra.mxu0 %v2285
      %2320 = vmatpush.msra.mxu0 %v2283
      %2321 = vmatpush.msra.mxu0 %v2281
      %2322 = vmatpush.msra.mxu0 %v2279
      %2323 = vmatpush.msra.mxu0 %v2277
      %2324 = vmatpush.msra.mxu0 %v2275
      %2325 = vmatpush.msra.mxu0 %v2273
      %2326 = vmatpush.msra.mxu0 %v2271
      %2327 = vmatpush.msra.mxu0 %v2269
      %2328 = vmatpush.msra.mxu0 %v2267
      %2329 = vmatpush.msra.mxu0 %v2265
      %2330 = vmatpush.msra.mxu0 %v2263
      %2331 = vmatmul.f32.gmra.mxu0 %v2293
      %v2332 = vpop.f32.mrf.mxu0
      %v2333 = vadd.f32 0.0, %v2332
      %2334 = vdwg.mxu0
      %v2335 = vadd.f32 %v2237, %v2313
      %v2336 = vadd.f32 %v2238, %v2333
      %v2339 = vrot.slane %v2336, 7
      %vm2340 = vcmask 1040384
      %v2341 = vsel %vm2340, %v2335, %v2339
      %v2343 = vlaneseq
      %vm2344 = vcmp.ge.s32.totalorder %v2343, 0
      %vm2345 = vcmp.lt.s32.totalorder %v2343, 248
      %vm2346 = vmand %vm2344, %vm2345
      %2347 = vst.msk [vmem:[%s359] sm:$0x3] %vm2346, %v2341
      %p2348 = scmp.lt.s32.totalorder %s23, 1
      %s2349 = scalar_select %p2348, %s23, 1
      %s2350 = smul.addr %s2349, 2
      %s2351 = scalar_lea.vmem %s10, %s2350
      // Predicated region
      $region61: #{decode_forward.1} parent=59 // pred_check
        %p2352 = pneg %p256
      $region62: #{decode_forward.1} parent=59 // pred_check_branch
        %2354 = sbr.rel (%p2352) target = $region64
      $region63: #{decode_forward.1} parent=59 // pred_region
        _
      $region64: #{decode_forward.1} parent=59 // pred_fallthru
        _
    $region60: #{decode_forward.1} parent=5 // pred_fallthru
      _
    %p2355 = scmp.le.s32.totalorder 2, %s18
    // Predicated region
    $region65: #{decode_forward.1} parent=5 // pred_check
      %p2356 = pneg %p2355
    $region66: #{decode_forward.1} parent=5 // pred_check_branch
      %2358 = sbr.rel (%p2356) target = $region68
    $region67: #{decode_forward.1} parent=5 // pred_region
      %s2359 = ssub.s32 %s18, 2
      // Predicated region
      $region69: #{decode_forward.1} parent=67 // pred_check
        %p2360 = pneg %p262
      $region70: #{decode_forward.1} parent=67 // pred_check_branch
        %2362 = sbr.rel (%p2360) target = $region72
      $region71: #{decode_forward.1} parent=67 // pred_region
        %p2363 = scmp.lt.s32.totalorder %s24, 1
        %s2364 = scalar_select %p2363, %s24, 1
        %s2365 = smul.addr %s2364, 2
        %s2366 = scalar_lea.vmem %s10, %s2365
      $region72: #{decode_forward.1} parent=67 // pred_fallthru
        _
    $region68: #{decode_forward.1} parent=5 // pred_fallthru
      _
  $region6: #{decode_forward.1} parent=0 // loop_footer
    %s22 = sadd.s32 1, %s18
  $region7: #{decode_forward.1} parent=0 // loop_footer_branch
    %17 = sbr.rel target = $region3
  $region8: #{decode_forward.1} parent=0 // loop_exit
    _

</llo_original>
